<compile_context>
chip_gen: v6e
topology: v6e:2x2x1
jax: 0.10.0
libtpu: 0.0.40
codegen_flags: <defaults>
</compile_context>

<pallas_src>
import jax
import jax.numpy as jnp
from jax.experimental import pallas as pl
from jax.experimental.pallas import tpu as pltpu

EPS = 1e-5
CITY_CHUNK = 256            # rows per streamed city chunk (multiple of 8)
MAX_RESIDENT_BATCH = 4096   # whole-batch-resident cap, sized for v7x's 64 MiB VMEM
ONE_PASS_BN = False         # optional single-sweep BN stats (minor numerics change)


# ---------------------------------------------------------------------------
# math helpers (shared by the Pallas kernel and the pure-JAX reference)
# ---------------------------------------------------------------------------
def _silu(x):
    # SiLU = x*sigmoid(x) == (x/2)*(tanh(x/2)+1); keeps the transcendental on the EUP
    # slot, avoids exp(-x) overflow, and uses one fewer VPU multiply than the
    # 0.5*tanh(0.5x)+0.5 form.
    t = 0.5 * x
    return t * (jnp.tanh(t) + 1.0)


def _batchnorm_train(h, gamma, beta):
    # nn.BatchNorm1d training-mode normalization: batch mean, biased batch var, eps=1e-5.
    mean = jnp.mean(h, axis=0, keepdims=True)
    diff = h - mean
    if ONE_PASS_BN:
        var = jnp.mean(h * h, axis=0, keepdims=True) - mean * mean
    else:
        var = jnp.mean(diff * diff, axis=0, keepdims=True)
    scale = gamma * jax.lax.rsqrt(var + EPS)
    return diff * scale + beta


# ---------------------------------------------------------------------------
# packing layout for the small operands (static, architecture is fixed)
# Each segment gets a 128-lane-aligned slot -> all in-kernel slices are lane-aligned.
# ---------------------------------------------------------------------------
_WPACK_LAYOUT = (
    ("c2w1", 48, 12), ("c2w2", 12, 3), ("cbw", 3, 3),
    ("a1w1", 44, 32), ("a1w2", 32, 16), ("abw", 16, 16),
    ("bwx", 9, 64), ("bwc", 3, 64), ("bwa", 16, 64), ("bw2", 64, 128),
)
_WPACK_ROWS = 64
_WPACK_SLOT = 128
_WPACK_OFFS = {n: (i * _WPACK_SLOT, din, dout)
               for i, (n, din, dout) in enumerate(_WPACK_LAYOUT)}
_WPACK_LANES = _WPACK_SLOT * len(_WPACK_LAYOUT)

_VPACK_LAYOUT = (
    ("c1v1", 3, 192), ("c1v2", 3, 48), ("c2v1", 3, 12), ("c2v2", 3, 3),
    ("cbb", 1, 3),
    ("a1v1", 3, 32), ("a1v2", 3, 16), ("abb", 1, 16),
    ("bv1", 3, 64), ("bv2", 3, 128),
)


def _vpack_layout():
    offs, off = {}, 0
    for n, r, d in _VPACK_LAYOUT:
        offs[n] = (off, r, d)
        off += ((d + 127) // 128) * 128
    return offs, off


_VPACK_OFFS, _VPACK_LANES = _vpack_layout()


def _chunk_plan(batch):
    rows = min(CITY_CHUNK, batch)
    chunks, st = [], 0
    while st < batch:
        r = min(rows, batch - st)
        chunks.append((st, r))
        st += r
    return rows, chunks


# ---------------------------------------------------------------------------
# fused Pallas kernel: the entire BidPredictor forward pass (gridless)
# ---------------------------------------------------------------------------
def _make_kernel(chunks):
    n_chunks = len(chunks)

    def kernel(x_ref, city_hbm, align_ref, c1w1_ref, c1w2_ref, wpack_ref, vpack_ref,
               o_ref, city_buf, city_sem, h1_ref):

        def wmat(name):
            off, din, dout = _WPACK_OFFS[name]
            return wpack_ref[0:din, off:off + dout]

        def vrow(name):
            off, r, d = _VPACK_OFFS[name]
            return vpack_ref[0:r, off:off + d]

        def dotf(a, b):
            return jnp.dot(a, b, preferred_element_type=jnp.float32)

        # ---- city Residual[768,192,48]: layer1 streamed from HBM ------------
        # Manual double-buffered DMA pipeline (P4): prefetch chunk i+1 while the
        # 768x192 MXU matmul runs on chunk i.  f32 city is cast to bf16 in-kernel.
        descs = [None, None]

        def start_dma(idx, slot):
            st, rows = chunks[idx]
            cp = pltpu.make_async_copy(city_hbm.at[pl.ds(st, rows)],
                                       city_buf.at[slot, pl.ds(0, rows)],
                                       city_sem.at[slot])
            cp.start()
            descs[slot] = cp

        start_dma(0, 0)
        w1 = c1w1_ref[...]                                     # bf16 [768,192]
        for idx, (st, rows) in enumerate(chunks):
            slot = idx & 1
            descs[slot].wait()
            if idx + 1 < n_chunks:
                start_dma(idx + 1, 1 - slot)                   # overlap DMA with MXU
            chunk = city_buf[slot, pl.ds(0, rows), :].astype(jnp.bfloat16)
            h1_ref[pl.ds(st, rows), :] = dotf(chunk, w1)       # f32 accumulation

        v = vrow("c1v1")
        h = h1_ref[...] + v[0:1, :]
        h = _batchnorm_train(_silu(h), v[1:2, :], v[2:3, :])
        v = vrow("c1v2")
        h = dotf(h, c1w2_ref[...]) + v[0:1, :]
        h = _batchnorm_train(_silu(h), v[1:2, :], v[2:3, :])          # [B,48]

        # ---- city Residual[48,12,3] + bottleneck Linear(3,3)+SiLU -----------
        v = vrow("c2v1")
        h = dotf(h, wmat("c2w1")) + v[0:1, :]
        h = _batchnorm_train(_silu(h), v[1:2, :], v[2:3, :])
        v = vrow("c2v2")
        h = dotf(h, wmat("c2w2")) + v[0:1, :]
        h = _batchnorm_train(_silu(h), v[1:2, :], v[2:3, :])          # [B,3]
        city_feat = _silu(dotf(h, wmat("cbw")) + vrow("cbb"))         # [B,3]

        # ---- alignment Residual[44,32,16] + bottleneck Linear(16,16)+SiLU ----
        v = vrow("a1v1")
        h = dotf(align_ref[...], wmat("a1w1")) + v[0:1, :]
        h = _batchnorm_train(_silu(h), v[1:2, :], v[2:3, :])
        v = vrow("a1v2")
        h = dotf(h, wmat("a1w2")) + v[0:1, :]
        h = _batchnorm_train(_silu(h), v[1:2, :], v[2:3, :])          # [B,16]
        align_feat = _silu(dotf(h, wmat("abw")) + vrow("abb"))        # [B,16]

        # ---- backbone Residual[28,64,128]; concat([x,city,align]) folded into
        #      three partial matmuls accumulated in f32 (no lane-concat needed).
        v = vrow("bv1")
        h = (dotf(x_ref[...], wmat("bwx"))
             + dotf(city_feat, wmat("bwc"))
             + dotf(align_feat, wmat("bwa"))
             + v[0:1, :])
        h = _batchnorm_train(_silu(h), v[1:2, :], v[2:3, :])
        v = vrow("bv2")
        h = dotf(h, wmat("bw2")) + v[0:1, :]
        o_ref[...] = _batchnorm_train(_silu(h), v[1:2, :], v[2:3, :])  # [B,128]

    return kernel


# ---------------------------------------------------------------------------
# wrapper: single gridless pallas_call; weights resident, city streamed from HBM
# ---------------------------------------------------------------------------
def bid_predictor_forward(params, x, city, alignment):
    city = city.reshape((-1, 768))
    alignment = alignment.reshape((-1, 44))
    x = x.reshape((-1, 9))
    B = x.shape[0]
    assert B >= 8 and B % 8 == 0, "caller contract: batch >= 8 and a multiple of 8"
    # TODO(synk): beyond MAX_RESIDENT_BATCH, add a batch-tiled grid with GLOBAL BatchNorm
    # stats (sum / sum-of-squares accumulators + a second normalize pass) and only then
    # mark the batch axis "parallel" so v7x's second TensorCore is used.
    assert B <= MAX_RESIDENT_BATCH, "whole-batch-resident kernel: tile the batch"

    kp = params["kernel"]
    buf_rows, chunks = _chunk_plan(B)

    # VMEM budget: ~0.7 MiB packed weights + city double buffer + ~8 KiB/row activations
    # (lane-padded intermediates + compiler temps).  Clamp to 48 MiB so the sizing also
    # fits v7x's 64 MiB physical VMEM (v5e/v6e have 128 MiB) with headroom.
    est = (2 * buf_rows * 768 * 4) + (2 << 20) + B * 8 * 1024
    vmem_limit = int(min(max(est, 16 << 20), 48 << 20))

    vmem = pltpu.MemorySpace.VMEM
    return pl.pallas_call(
        _make_kernel(chunks),
        out_shape=jax.ShapeDtypeStruct((B, 128), jnp.float32),
        in_specs=[
            pl.BlockSpec(memory_space=vmem),     # x          [B,9]
            pl.BlockSpec(memory_space=pl.ANY),   # city       [B,768] stays in HBM (streamed)
            pl.BlockSpec(memory_space=vmem),     # alignment  [B,44]
            pl.BlockSpec(memory_space=vmem),     # c1w1 bf16  [768,192]
            pl.BlockSpec(memory_space=vmem),     # c1w2       [192,48]
            pl.BlockSpec(memory_space=vmem),     # wpack      [64,1280]
            pl.BlockSpec(memory_space=vmem),     # vpack      [3,1408]
        ],
        out_specs=pl.BlockSpec(memory_space=vmem),
        scratch_shapes=[
            pltpu.VMEM((2, buf_rows, 768), jnp.float32),   # city double buffer
            pltpu.SemaphoreType.DMA((2,)),                 # per-slot DMA semaphores
            pltpu.VMEM((B, 192), jnp.float32),             # pre-BN res1 activation
        ],
        compiler_params=pltpu.CompilerParams(vmem_limit_bytes=vmem_limit),
    )(x, city, alignment, kp["c1w1_bf16"], kp["c1w2"], kp["wpack"], kp["vpack"])


# ---------------------------------------------------------------------------
# deterministic parameter initialization (synthetic; shapes from __init__)
# ---------------------------------------------------------------------------
def _init_linear(key, din, dout):
    kw, kb = jax.random.split(key)
    bound = 1.0 / (din ** 0.5)
    w = jax.random.uniform(kw, (din, dout), jnp.float32, -bound, bound)
    b = jax.random.uniform(kb, (1, dout), jnp.float32, -bound, bound)
    return w, b


def _init_bn(key, d):
    kg, kb = jax.random.split(key)
    gamma = 1.0 + 0.1 * jax.random.normal(kg, (1, d), jnp.float32)
    beta = 0.1 * jax.random.normal(kb, (1, d), jnp.float32)
    return gamma, beta


def _init_residual(key, dims):
    d0, d1, d2 = dims
    k1, k2, k3, k4 = jax.random.split(key, 4)
    w1, b1 = _init_linear(k1, d0, d1)
    g1, be1 = _init_bn(k2, d1)
    w2, b2 = _init_linear(k3, d1, d2)
    g2, be2 = _init_bn(k4, d2)
    v1 = jnp.concatenate([b1, g1, be1], axis=0)   # [3, d1] packed (bias, gamma, beta)
    v2 = jnp.concatenate([b2, g2, be2], axis=0)   # [3, d2]
    # NOTE: Residual.project (Linear(d0, d2)) exists in __init__ but is unused in forward().
    return (w1, v1, w2, v2)


def _pack_kernel_params(raw):
    """One-time packing of all kernel operands (incl. the bf16 pre-cast of c1w1)."""
    c1w1, c1v1, c1w2, c1v2 = raw["city_res1"]
    c2w1, c2v1, c2w2, c2v2 = raw["city_res2"]
    cbw, cbb = raw["city_bottleneck"]
    a1w1, a1v1, a1w2, a1v2 = raw["align_res"]
    abw, abb = raw["align_bottleneck"]
    bw1, bv1, bw2, bv2 = raw["backbone_res"]

    wmats = {"c2w1": c2w1, "c2w2": c2w2, "cbw": cbw, "a1w1": a1w1, "a1w2": a1w2,
             "abw": abw, "bwx": bw1[0:9], "bwc": bw1[9:12], "bwa": bw1[12:28], "bw2": bw2}
    wpack = jnp.zeros((_WPACK_ROWS, _WPACK_LANES), jnp.float32)
    for n, (off, din, dout) in _WPACK_OFFS.items():
        wpack = wpack.at[0:din, off:off + dout].set(wmats[n])

    vmats = {"c1v1": c1v1, "c1v2": c1v2, "c2v1": c2v1, "c2v2": c2v2, "cbb": cbb,
             "a1v1": a1v1, "a1v2": a1v2, "abb": abb, "bv1": bv1, "bv2": bv2}
    vpack = jnp.zeros((3, _VPACK_LANES), jnp.float32)
    for n, (off, r, d) in _VPACK_OFFS.items():
        vpack = vpack.at[0:r, off:off + d].set(vmats[n])

    return {"c1w1_bf16": c1w1.astype(jnp.bfloat16),   # pre-cast once, not per call
            "c1w2": c1w2, "wpack": wpack, "vpack": vpack}


def init_bid_predictor(key, loc_tokenizer_latent_dim=768):
    assert loc_tokenizer_latent_dim == 768, "forward() hard-codes City.reshape([-1, 768])"
    keys = jax.random.split(key, 6)
    params = {}
    # City_compressor = AutoEncoder(dim=768): layers [768, 192, 48, 12, 3]
    params["city_res1"] = _init_residual(keys[0], (768, 192, 48))
    params["city_res2"] = _init_residual(keys[1], (48, 12, 3))
    params["city_bottleneck"] = _init_linear(keys[2], 3, 3)
    # alignment = AutoEncoder(layers=[44, 32, 16])
    params["align_res"] = _init_residual(keys[3], (44, 32, 16))
    params["align_bottleneck"] = _init_linear(keys[4], 16, 16)
    # backbone = Residual([28, 64, 128])   (num_features = 16 + 3 + 9 = 28)
    params["backbone_res"] = _init_residual(keys[5], (28, 64, 128))
    # NOTE: self.classifier (Linear(128, 2)) is not used by BidPredictor.forward().
    params["kernel"] = _pack_kernel_params(params)
    return params


# ---------------------------------------------------------------------------
# pure-JAX reference for correctness checking (same numerics/formulation)
# ---------------------------------------------------------------------------
def _ref_residual(x, block, bf16_first=False):
    w1, v1, w2, v2 = block
    b1, g1, be1 = v1[0:1], v1[1:2], v1[2:3]
    b2, g2, be2 = v2[0:1], v2[1:2], v2[2:3]
    if bf16_first:
        h = jnp.dot(x.astype(jnp.bfloat16), w1.astype(jnp.bfloat16),
                    preferred_element_type=jnp.float32) + b1
    else:
        h = x @ w1 + b1
    h = _batchnorm_train(_silu(h), g1, be1)
    h = h @ w2 + b2
    return _batchnorm_train(_silu(h), g2, be2)


def _ref_forward(params, x, city, alignment):
    city = city.reshape((-1, 768))
    alignment = alignment.reshape((-1, 44))
    x = x.reshape((-1, 9))
    h = _ref_residual(city, params["city_res1"], bf16_first=True)
    h = _ref_residual(h, params["city_res2"])
    wc, bc = params["city_bottleneck"]
    city_features = _silu(h @ wc + bc)
    a = _ref_residual(alignment, params["align_res"])
    wa, ba = params["align_bottleneck"]
    align_features = _silu(a @ wa + ba)
    feats = jnp.concatenate([x, city_features, align_features], axis=-1)
    assert feats.shape[-1] == 28
    return _ref_residual(feats, params["backbone_res"])


# ---------------------------------------------------------------------------
if __name__ == "__main__":
    key = jax.random.PRNGKey(0)
    kp, kx, kc, ka = jax.random.split(key, 4)
    params = init_bid_predictor(kp, loc_tokenizer_latent_dim=768)

    fwd = jax.jit(bid_predictor_forward)

    # B=8 exercises the single-chunk path; B=512 exercises the 2-chunk double-buffered
    # city streaming pipeline (and gives decent MXU row utilization per the review).
    for B in (8, 512):
        x = jax.random.normal(jax.random.fold_in(kx, B), (B, 9), jnp.float32)
        city = jax.random.normal(jax.random.fold_in(kc, B), (B, 768), jnp.float32)
        alignment = jax.random.normal(jax.random.fold_in(ka, B), (B, 44), jnp.float32)

        out = jax.block_until_ready(fwd(params, x, city, alignment))
        ref = _ref_forward(params, x, city, alignment)

        assert out.shape == (B, 128), out.shape
        assert bool(jnp.all(jnp.isfinite(out)))
        max_err = float(jnp.max(jnp.abs(out - ref)))
        assert jnp.allclose(out, ref, atol=1e-2, rtol=1e-2), (B, max_err)

    print("KERNEL_OK")
</pallas_src>

<mosaic_0001>
module attributes {stable_mosaic.version = 11 : i64} {
  func.func @kernel(%arg0: memref<8x9xf32, #tpu.memory_space<vmem>>, %arg1: memref<8x768xf32, #tpu.memory_space<any>>, %arg2: memref<8x44xf32, #tpu.memory_space<vmem>>, %arg3: memref<768x192xbf16, #tpu.memory_space<vmem>>, %arg4: memref<192x48xf32, #tpu.memory_space<vmem>>, %arg5: memref<64x1280xf32, #tpu.memory_space<vmem>>, %arg6: memref<3x1408xf32, #tpu.memory_space<vmem>>, %arg7: memref<8x128xf32, #tpu.memory_space<vmem>>, %arg8: memref<2x8x768xf32, #tpu.memory_space<vmem>>, %arg9: memref<2x!tpu.dma_semaphore, #tpu.memory_space<semaphore_mem>>, %arg10: memref<8x192xf32, #tpu.memory_space<vmem>>) attributes {dimension_semantics = [], scalar_prefetch = 0 : i64, scratch_operands = 3 : i64, tpu.core_type = #tpu.core_type<tc>} {
    %c0_i32 = arith.constant 0 : i32
    %c0_i32_0 = arith.constant 0 : i32
    %c0_i32_1 = arith.constant 0 : i32
    %c0_i32_2 = arith.constant 0 : i32
    %0 = tpu.memref_slice %arg1[%c0_i32_1, %c0_i32_2] : memref<8x768xf32, #tpu.memory_space<any>> -> memref<8x768xf32, #tpu.memory_space<any>>
    %c0_i32_3 = arith.constant 0 : i32
    %c0_i32_4 = arith.constant 0 : i32
    %1 = tpu.memref_slice %arg8[%c0_i32, %c0_i32_3, %c0_i32_4] : memref<2x8x768xf32, #tpu.memory_space<vmem>> -> memref<1x8x768xf32, #tpu.memory_space<vmem>>
    %2 = tpu.memref_squeeze %1 : memref<1x8x768xf32, #tpu.memory_space<vmem>> -> memref<8x768xf32, #tpu.memory_space<vmem>>
    %3 = tpu.memref_slice %arg9[%c0_i32_0] : memref<2x!tpu.dma_semaphore, #tpu.memory_space<semaphore_mem>> -> memref<1x!tpu.dma_semaphore, #tpu.memory_space<semaphore_mem>>
    %4 = tpu.memref_squeeze %3 : memref<1x!tpu.dma_semaphore, #tpu.memory_space<semaphore_mem>> -> memref<!tpu.dma_semaphore, #tpu.memory_space<semaphore_mem>>
    tpu.enqueue_dma source(%0 : memref<8x768xf32, #tpu.memory_space<any>>) target(%2 : memref<8x768xf32, #tpu.memory_space<vmem>>) target_semaphore(%4 : memref<!tpu.dma_semaphore, #tpu.memory_space<semaphore_mem>>)
    %c0 = arith.constant 0 : index
    %c0_5 = arith.constant 0 : index
    %5 = vector.load %arg3[%c0, %c0_5] : memref<768x192xbf16, #tpu.memory_space<vmem>>, vector<768x192xbf16>
    %c0_i32_6 = arith.constant 0 : i32
    %c0_i32_7 = arith.constant 0 : i32
    %c0_i32_8 = arith.constant 0 : i32
    %c0_i32_9 = arith.constant 0 : i32
    %6 = tpu.memref_slice %arg1[%c0_i32_8, %c0_i32_9] : memref<8x768xf32, #tpu.memory_space<any>> -> memref<8x768xf32, #tpu.memory_space<any>>
    %c0_i32_10 = arith.constant 0 : i32
    %c0_i32_11 = arith.constant 0 : i32
    %7 = tpu.memref_slice %arg8[%c0_i32_6, %c0_i32_10, %c0_i32_11] : memref<2x8x768xf32, #tpu.memory_space<vmem>> -> memref<1x8x768xf32, #tpu.memory_space<vmem>>
    %8 = tpu.memref_squeeze %7 : memref<1x8x768xf32, #tpu.memory_space<vmem>> -> memref<8x768xf32, #tpu.memory_space<vmem>>
    %9 = tpu.memref_slice %arg9[%c0_i32_7] : memref<2x!tpu.dma_semaphore, #tpu.memory_space<semaphore_mem>> -> memref<1x!tpu.dma_semaphore, #tpu.memory_space<semaphore_mem>>
    %10 = tpu.memref_squeeze %9 : memref<1x!tpu.dma_semaphore, #tpu.memory_space<semaphore_mem>> -> memref<!tpu.dma_semaphore, #tpu.memory_space<semaphore_mem>>
    tpu.wait_dma2 semaphore(%10 : memref<!tpu.dma_semaphore, #tpu.memory_space<semaphore_mem>>) src(%6 : memref<8x768xf32, #tpu.memory_space<any>>) dst(%8 : memref<8x768xf32, #tpu.memory_space<vmem>>)
    %c0_12 = arith.constant 0 : index
    %c0_13 = arith.constant 0 : index
    %c0_14 = arith.constant 0 : index
    %11 = vector.load %arg8[%c0_12, %c0_13, %c0_14] : memref<2x8x768xf32, #tpu.memory_space<vmem>>, vector<1x8x768xf32>
    %12 = vector.shape_cast %11 : vector<1x8x768xf32> to vector<8x768xf32>
    %13 = arith.truncf %12 : vector<8x768xf32> to vector<8x768xbf16>
    %cst = arith.constant dense<0.000000e+00> : vector<8x192xf32>
    %14 = tpu.matmul %13, %5, %cst {dimension_numbers = #tpu.dot_dimension_numbers<[1], [0], [0], [1], [0, 0, 1, 1], [], []>} : vector<8x768xbf16>, vector<768x192xbf16>, vector<8x192xf32> -> vector<8x192xf32>
    %c0_15 = arith.constant 0 : index
    %c0_16 = arith.constant 0 : index
    %15 = vector.load %arg10[%c0_15, %c0_16] : memref<8x192xf32, #tpu.memory_space<vmem>>, vector<8x192xf32>
    tpu.vector_store %arg10[%c0_15, %c0_16], %14 {strides = array<i32>} : memref<8x192xf32, #tpu.memory_space<vmem>>, vector<8x192xf32>,
    %c0_17 = arith.constant 0 : index
    %c0_18 = arith.constant 0 : index
    %16 = vector.load %arg6[%c0_17, %c0_18] : memref<3x1408xf32, #tpu.memory_space<vmem>>, vector<3x192xf32>
    %c0_19 = arith.constant 0 : index
    %c0_20 = arith.constant 0 : index
    %17 = vector.load %arg10[%c0_19, %c0_20] : memref<8x192xf32, #tpu.memory_space<vmem>>, vector<8x192xf32>
    %18 = vector.extract_strided_slice %16 {offsets = [0, 0], sizes = [1, 192], strides = [1, 1]} : vector<3x192xf32> to vector<1x192xf32>
    %19 = vector.broadcast %18 : vector<1x192xf32> to vector<8x192xf32>
    %20 = arith.addf %17, %19 : vector<8x192xf32>
    %cst_21 = arith.constant 5.000000e-01 : f32
    %21 = vector.broadcast %cst_21 : f32 to vector<8x192xf32>
    %22 = arith.mulf %21, %20 : vector<8x192xf32>
    %23 = math.tanh %22 : vector<8x192xf32>
    %cst_22 = arith.constant 1.000000e+00 : f32
    %24 = vector.broadcast %cst_22 : f32 to vector<8x192xf32>
    %25 = arith.addf %23, %24 : vector<8x192xf32>
    %26 = arith.mulf %22, %25 : vector<8x192xf32>
    %27 = vector.extract_strided_slice %16 {offsets = [1, 0], sizes = [1, 192], strides = [1, 1]} : vector<3x192xf32> to vector<1x192xf32>
    %28 = vector.extract_strided_slice %16 {offsets = [2, 0], sizes = [1, 192], strides = [1, 1]} : vector<3x192xf32> to vector<1x192xf32>
    %cst_23 = arith.constant dense<0.000000e+00> : vector<192xf32>
    %29 = vector.multi_reduction <add>, %26, %cst_23 [0] : vector<8x192xf32> to vector<192xf32>
    %30 = vector.shape_cast %29 : vector<192xf32> to vector<1x192xf32>
    %cst_24 = arith.constant 8.000000e+00 : f32
    %31 = vector.broadcast %cst_24 : f32 to vector<1x192xf32>
    %32 = arith.divf %30, %31 : vector<1x192xf32>
    %33 = vector.broadcast %32 : vector<1x192xf32> to vector<8x192xf32>
    %34 = arith.subf %26, %33 : vector<8x192xf32>
    %35 = arith.mulf %34, %34 : vector<8x192xf32>
    %cst_25 = arith.constant dense<0.000000e+00> : vector<192xf32>
    %36 = vector.multi_reduction <add>, %35, %cst_25 [0] : vector<8x192xf32> to vector<192xf32>
    %37 = vector.shape_cast %36 : vector<192xf32> to vector<1x192xf32>
    %cst_26 = arith.constant 8.000000e+00 : f32
    %38 = vector.broadcast %cst_26 : f32 to vector<1x192xf32>
    %39 = arith.divf %37, %38 : vector<1x192xf32>
    %cst_27 = arith.constant 9.99999974E-6 : f32
    %40 = vector.broadcast %cst_27 : f32 to vector<1x192xf32>
    %41 = arith.addf %39, %40 : vector<1x192xf32>
    %42 = math.rsqrt %41 : vector<1x192xf32>
    %43 = arith.mulf %27, %42 : vector<1x192xf32>
    %44 = vector.broadcast %43 : vector<1x192xf32> to vector<8x192xf32>
    %45 = arith.mulf %34, %44 : vector<8x192xf32>
    %46 = vector.broadcast %28 : vector<1x192xf32> to vector<8x192xf32>
    %47 = arith.addf %45, %46 : vector<8x192xf32>
    %c0_28 = arith.constant 0 : index
    %c256 = arith.constant 256 : index
    %48 = vector.load %arg6[%c0_28, %c256] : memref<3x1408xf32, #tpu.memory_space<vmem>>, vector<3x48xf32>
    %c0_29 = arith.constant 0 : index
    %c0_30 = arith.constant 0 : index
    %49 = vector.load %arg4[%c0_29, %c0_30] : memref<192x48xf32, #tpu.memory_space<vmem>>, vector<192x48xf32>
    %cst_31 = arith.constant dense<0.000000e+00> : vector<8x48xf32>
    %50 = tpu.matmul %47, %49, %cst_31 {dimension_numbers = #tpu.dot_dimension_numbers<[1], [0], [0], [1], [0, 0, 1, 1], [], []>} : vector<8x192xf32>, vector<192x48xf32>, vector<8x48xf32> -> vector<8x48xf32>
    %51 = vector.extract_strided_slice %48 {offsets = [0, 0], sizes = [1, 48], strides = [1, 1]} : vector<3x48xf32> to vector<1x48xf32>
    %52 = vector.broadcast %51 : vector<1x48xf32> to vector<8x48xf32>
    %53 = arith.addf %50, %52 : vector<8x48xf32>
    %cst_32 = arith.constant 5.000000e-01 : f32
    %54 = vector.broadcast %cst_32 : f32 to vector<8x48xf32>
    %55 = arith.mulf %54, %53 : vector<8x48xf32>
    %56 = math.tanh %55 : vector<8x48xf32>
    %cst_33 = arith.constant 1.000000e+00 : f32
    %57 = vector.broadcast %cst_33 : f32 to vector<8x48xf32>
    %58 = arith.addf %56, %57 : vector<8x48xf32>
    %59 = arith.mulf %55, %58 : vector<8x48xf32>
    %60 = vector.extract_strided_slice %48 {offsets = [1, 0], sizes = [1, 48], strides = [1, 1]} : vector<3x48xf32> to vector<1x48xf32>
    %61 = vector.extract_strided_slice %48 {offsets = [2, 0], sizes = [1, 48], strides = [1, 1]} : vector<3x48xf32> to vector<1x48xf32>
    %cst_34 = arith.constant dense<0.000000e+00> : vector<48xf32>
    %62 = vector.multi_reduction <add>, %59, %cst_34 [0] : vector<8x48xf32> to vector<48xf32>
    %63 = vector.shape_cast %62 : vector<48xf32> to vector<1x48xf32>
    %cst_35 = arith.constant 8.000000e+00 : f32
    %64 = vector.broadcast %cst_35 : f32 to vector<1x48xf32>
    %65 = arith.divf %63, %64 : vector<1x48xf32>
    %66 = vector.broadcast %65 : vector<1x48xf32> to vector<8x48xf32>
    %67 = arith.subf %59, %66 : vector<8x48xf32>
    %68 = arith.mulf %67, %67 : vector<8x48xf32>
    %cst_36 = arith.constant dense<0.000000e+00> : vector<48xf32>
    %69 = vector.multi_reduction <add>, %68, %cst_36 [0] : vector<8x48xf32> to vector<48xf32>
    %70 = vector.shape_cast %69 : vector<48xf32> to vector<1x48xf32>
    %cst_37 = arith.constant 8.000000e+00 : f32
    %71 = vector.broadcast %cst_37 : f32 to vector<1x48xf32>
    %72 = arith.divf %70, %71 : vector<1x48xf32>
    %cst_38 = arith.constant 9.99999974E-6 : f32
    %73 = vector.broadcast %cst_38 : f32 to vector<1x48xf32>
    %74 = arith.addf %72, %73 : vector<1x48xf32>
    %75 = math.rsqrt %74 : vector<1x48xf32>
    %76 = arith.mulf %60, %75 : vector<1x48xf32>
    %77 = vector.broadcast %76 : vector<1x48xf32> to vector<8x48xf32>
    %78 = arith.mulf %67, %77 : vector<8x48xf32>
    %79 = vector.broadcast %61 : vector<1x48xf32> to vector<8x48xf32>
    %80 = arith.addf %78, %79 : vector<8x48xf32>
    %c0_39 = arith.constant 0 : index
    %c384 = arith.constant 384 : index
    %81 = vector.load %arg6[%c0_39, %c384] : memref<3x1408xf32, #tpu.memory_space<vmem>>, vector<3x12xf32>
    %c0_40 = arith.constant 0 : index
    %c0_41 = arith.constant 0 : index
    %82 = vector.load %arg5[%c0_40, %c0_41] : memref<64x1280xf32, #tpu.memory_space<vmem>>, vector<48x12xf32>
    %cst_42 = arith.constant dense<0.000000e+00> : vector<8x12xf32>
    %83 = tpu.matmul %80, %82, %cst_42 {dimension_numbers = #tpu.dot_dimension_numbers<[1], [0], [0], [1], [0, 0, 1, 1], [], []>} : vector<8x48xf32>, vector<48x12xf32>, vector<8x12xf32> -> vector<8x12xf32>
    %84 = vector.extract_strided_slice %81 {offsets = [0, 0], sizes = [1, 12], strides = [1, 1]} : vector<3x12xf32> to vector<1x12xf32>
    %85 = vector.broadcast %84 : vector<1x12xf32> to vector<8x12xf32>
    %86 = arith.addf %83, %85 : vector<8x12xf32>
    %cst_43 = arith.constant 5.000000e-01 : f32
    %87 = vector.broadcast %cst_43 : f32 to vector<8x12xf32>
    %88 = arith.mulf %87, %86 : vector<8x12xf32>
    %89 = math.tanh %88 : vector<8x12xf32>
    %cst_44 = arith.constant 1.000000e+00 : f32
    %90 = vector.broadcast %cst_44 : f32 to vector<8x12xf32>
    %91 = arith.addf %89, %90 : vector<8x12xf32>
    %92 = arith.mulf %88, %91 : vector<8x12xf32>
    %93 = vector.extract_strided_slice %81 {offsets = [1, 0], sizes = [1, 12], strides = [1, 1]} : vector<3x12xf32> to vector<1x12xf32>
    %94 = vector.extract_strided_slice %81 {offsets = [2, 0], sizes = [1, 12], strides = [1, 1]} : vector<3x12xf32> to vector<1x12xf32>
    %cst_45 = arith.constant dense<0.000000e+00> : vector<12xf32>
    %95 = vector.multi_reduction <add>, %92, %cst_45 [0] : vector<8x12xf32> to vector<12xf32>
    %96 = vector.shape_cast %95 : vector<12xf32> to vector<1x12xf32>
    %cst_46 = arith.constant 8.000000e+00 : f32
    %97 = vector.broadcast %cst_46 : f32 to vector<1x12xf32>
    %98 = arith.divf %96, %97 : vector<1x12xf32>
    %99 = vector.broadcast %98 : vector<1x12xf32> to vector<8x12xf32>
    %100 = arith.subf %92, %99 : vector<8x12xf32>
    %101 = arith.mulf %100, %100 : vector<8x12xf32>
    %cst_47 = arith.constant dense<0.000000e+00> : vector<12xf32>
    %102 = vector.multi_reduction <add>, %101, %cst_47 [0] : vector<8x12xf32> to vector<12xf32>
    %103 = vector.shape_cast %102 : vector<12xf32> to vector<1x12xf32>
    %cst_48 = arith.constant 8.000000e+00 : f32
    %104 = vector.broadcast %cst_48 : f32 to vector<1x12xf32>
    %105 = arith.divf %103, %104 : vector<1x12xf32>
    %cst_49 = arith.constant 9.99999974E-6 : f32
    %106 = vector.broadcast %cst_49 : f32 to vector<1x12xf32>
    %107 = arith.addf %105, %106 : vector<1x12xf32>
    %108 = math.rsqrt %107 : vector<1x12xf32>
    %109 = arith.mulf %93, %108 : vector<1x12xf32>
    %110 = vector.broadcast %109 : vector<1x12xf32> to vector<8x12xf32>
    %111 = arith.mulf %100, %110 : vector<8x12xf32>
    %112 = vector.broadcast %94 : vector<1x12xf32> to vector<8x12xf32>
    %113 = arith.addf %111, %112 : vector<8x12xf32>
    %c0_50 = arith.constant 0 : index
    %c512 = arith.constant 512 : index
    %114 = vector.load %arg6[%c0_50, %c512] : memref<3x1408xf32, #tpu.memory_space<vmem>>, vector<3x3xf32>
    %c0_51 = arith.constant 0 : index
    %c128 = arith.constant 128 : index
    %115 = vector.load %arg5[%c0_51, %c128] : memref<64x1280xf32, #tpu.memory_space<vmem>>, vector<12x3xf32>
    %cst_52 = arith.constant dense<0.000000e+00> : vector<8x3xf32>
    %116 = tpu.matmul %113, %115, %cst_52 {dimension_numbers = #tpu.dot_dimension_numbers<[1], [0], [0], [1], [0, 0, 1, 1], [], []>} : vector<8x12xf32>, vector<12x3xf32>, vector<8x3xf32> -> vector<8x3xf32>
    %117 = vector.extract_strided_slice %114 {offsets = [0, 0], sizes = [1, 3], strides = [1, 1]} : vector<3x3xf32> to vector<1x3xf32>
    %118 = vector.broadcast %117 : vector<1x3xf32> to vector<8x3xf32>
    %119 = arith.addf %116, %118 : vector<8x3xf32>
    %cst_53 = arith.constant 5.000000e-01 : f32
    %120 = vector.broadcast %cst_53 : f32 to vector<8x3xf32>
    %121 = arith.mulf %120, %119 : vector<8x3xf32>
    %122 = math.tanh %121 : vector<8x3xf32>
    %cst_54 = arith.constant 1.000000e+00 : f32
    %123 = vector.broadcast %cst_54 : f32 to vector<8x3xf32>
    %124 = arith.addf %122, %123 : vector<8x3xf32>
    %125 = arith.mulf %121, %124 : vector<8x3xf32>
    %126 = vector.extract_strided_slice %114 {offsets = [1, 0], sizes = [1, 3], strides = [1, 1]} : vector<3x3xf32> to vector<1x3xf32>
    %127 = vector.extract_strided_slice %114 {offsets = [2, 0], sizes = [1, 3], strides = [1, 1]} : vector<3x3xf32> to vector<1x3xf32>
    %cst_55 = arith.constant dense<0.000000e+00> : vector<3xf32>
    %128 = vector.multi_reduction <add>, %125, %cst_55 [0] : vector<8x3xf32> to vector<3xf32>
    %129 = vector.shape_cast %128 : vector<3xf32> to vector<1x3xf32>
    %cst_56 = arith.constant 8.000000e+00 : f32
    %130 = vector.broadcast %cst_56 : f32 to vector<1x3xf32>
    %131 = arith.divf %129, %130 : vector<1x3xf32>
    %132 = vector.broadcast %131 : vector<1x3xf32> to vector<8x3xf32>
    %133 = arith.subf %125, %132 : vector<8x3xf32>
    %134 = arith.mulf %133, %133 : vector<8x3xf32>
    %cst_57 = arith.constant dense<0.000000e+00> : vector<3xf32>
    %135 = vector.multi_reduction <add>, %134, %cst_57 [0] : vector<8x3xf32> to vector<3xf32>
    %136 = vector.shape_cast %135 : vector<3xf32> to vector<1x3xf32>
    %cst_58 = arith.constant 8.000000e+00 : f32
    %137 = vector.broadcast %cst_58 : f32 to vector<1x3xf32>
    %138 = arith.divf %136, %137 : vector<1x3xf32>
    %cst_59 = arith.constant 9.99999974E-6 : f32
    %139 = vector.broadcast %cst_59 : f32 to vector<1x3xf32>
    %140 = arith.addf %138, %139 : vector<1x3xf32>
    %141 = math.rsqrt %140 : vector<1x3xf32>
    %142 = arith.mulf %126, %141 : vector<1x3xf32>
    %143 = vector.broadcast %142 : vector<1x3xf32> to vector<8x3xf32>
    %144 = arith.mulf %133, %143 : vector<8x3xf32>
    %145 = vector.broadcast %127 : vector<1x3xf32> to vector<8x3xf32>
    %146 = arith.addf %144, %145 : vector<8x3xf32>
    %c0_60 = arith.constant 0 : index
    %c256_61 = arith.constant 256 : index
    %147 = vector.load %arg5[%c0_60, %c256_61] : memref<64x1280xf32, #tpu.memory_space<vmem>>, vector<3x3xf32>
    %cst_62 = arith.constant dense<0.000000e+00> : vector<8x3xf32>
    %148 = tpu.matmul %146, %147, %cst_62 {dimension_numbers = #tpu.dot_dimension_numbers<[1], [0], [0], [1], [0, 0, 1, 1], [], []>} : vector<8x3xf32>, vector<3x3xf32>, vector<8x3xf32> -> vector<8x3xf32>
    %c0_63 = arith.constant 0 : index
    %c640 = arith.constant 640 : index
    %149 = vector.load %arg6[%c0_63, %c640] : memref<3x1408xf32, #tpu.memory_space<vmem>>, vector<1x3xf32>
    %150 = vector.broadcast %149 : vector<1x3xf32> to vector<8x3xf32>
    %151 = arith.addf %148, %150 : vector<8x3xf32>
    %cst_64 = arith.constant 5.000000e-01 : f32
    %152 = vector.broadcast %cst_64 : f32 to vector<8x3xf32>
    %153 = arith.mulf %152, %151 : vector<8x3xf32>
    %154 = math.tanh %153 : vector<8x3xf32>
    %cst_65 = arith.constant 1.000000e+00 : f32
    %155 = vector.broadcast %cst_65 : f32 to vector<8x3xf32>
    %156 = arith.addf %154, %155 : vector<8x3xf32>
    %157 = arith.mulf %153, %156 : vector<8x3xf32>
    %c0_66 = arith.constant 0 : index
    %c768 = arith.constant 768 : index
    %158 = vector.load %arg6[%c0_66, %c768] : memref<3x1408xf32, #tpu.memory_space<vmem>>, vector<3x32xf32>
    %c0_67 = arith.constant 0 : index
    %c0_68 = arith.constant 0 : index
    %159 = vector.load %arg2[%c0_67, %c0_68] : memref<8x44xf32, #tpu.memory_space<vmem>>, vector<8x44xf32>
    %c0_69 = arith.constant 0 : index
    %c384_70 = arith.constant 384 : index
    %160 = vector.load %arg5[%c0_69, %c384_70] : memref<64x1280xf32, #tpu.memory_space<vmem>>, vector<44x32xf32>
    %cst_71 = arith.constant dense<0.000000e+00> : vector<8x32xf32>
    %161 = tpu.matmul %159, %160, %cst_71 {dimension_numbers = #tpu.dot_dimension_numbers<[1], [0], [0], [1], [0, 0, 1, 1], [], []>} : vector<8x44xf32>, vector<44x32xf32>, vector<8x32xf32> -> vector<8x32xf32>
    %162 = vector.extract_strided_slice %158 {offsets = [0, 0], sizes = [1, 32], strides = [1, 1]} : vector<3x32xf32> to vector<1x32xf32>
    %163 = vector.broadcast %162 : vector<1x32xf32> to vector<8x32xf32>
    %164 = arith.addf %161, %163 : vector<8x32xf32>
    %cst_72 = arith.constant 5.000000e-01 : f32
    %165 = vector.broadcast %cst_72 : f32 to vector<8x32xf32>
    %166 = arith.mulf %165, %164 : vector<8x32xf32>
    %167 = math.tanh %166 : vector<8x32xf32>
    %cst_73 = arith.constant 1.000000e+00 : f32
    %168 = vector.broadcast %cst_73 : f32 to vector<8x32xf32>
    %169 = arith.addf %167, %168 : vector<8x32xf32>
    %170 = arith.mulf %166, %169 : vector<8x32xf32>
    %171 = vector.extract_strided_slice %158 {offsets = [1, 0], sizes = [1, 32], strides = [1, 1]} : vector<3x32xf32> to vector<1x32xf32>
    %172 = vector.extract_strided_slice %158 {offsets = [2, 0], sizes = [1, 32], strides = [1, 1]} : vector<3x32xf32> to vector<1x32xf32>
    %cst_74 = arith.constant dense<0.000000e+00> : vector<32xf32>
    %173 = vector.multi_reduction <add>, %170, %cst_74 [0] : vector<8x32xf32> to vector<32xf32>
    %174 = vector.shape_cast %173 : vector<32xf32> to vector<1x32xf32>
    %cst_75 = arith.constant 8.000000e+00 : f32
    %175 = vector.broadcast %cst_75 : f32 to vector<1x32xf32>
    %176 = arith.divf %174, %175 : vector<1x32xf32>
    %177 = vector.broadcast %176 : vector<1x32xf32> to vector<8x32xf32>
    %178 = arith.subf %170, %177 : vector<8x32xf32>
    %179 = arith.mulf %178, %178 : vector<8x32xf32>
    %cst_76 = arith.constant dense<0.000000e+00> : vector<32xf32>
    %180 = vector.multi_reduction <add>, %179, %cst_76 [0] : vector<8x32xf32> to vector<32xf32>
    %181 = vector.shape_cast %180 : vector<32xf32> to vector<1x32xf32>
    %cst_77 = arith.constant 8.000000e+00 : f32
    %182 = vector.broadcast %cst_77 : f32 to vector<1x32xf32>
    %183 = arith.divf %181, %182 : vector<1x32xf32>
    %cst_78 = arith.constant 9.99999974E-6 : f32
    %184 = vector.broadcast %cst_78 : f32 to vector<1x32xf32>
    %185 = arith.addf %183, %184 : vector<1x32xf32>
    %186 = math.rsqrt %185 : vector<1x32xf32>
    %187 = arith.mulf %171, %186 : vector<1x32xf32>
    %188 = vector.broadcast %187 : vector<1x32xf32> to vector<8x32xf32>
    %189 = arith.mulf %178, %188 : vector<8x32xf32>
    %190 = vector.broadcast %172 : vector<1x32xf32> to vector<8x32xf32>
    %191 = arith.addf %189, %190 : vector<8x32xf32>
    %c0_79 = arith.constant 0 : index
    %c896 = arith.constant 896 : index
    %192 = vector.load %arg6[%c0_79, %c896] : memref<3x1408xf32, #tpu.memory_space<vmem>>, vector<3x16xf32>
    %c0_80 = arith.constant 0 : index
    %c512_81 = arith.constant 512 : index
    %193 = vector.load %arg5[%c0_80, %c512_81] : memref<64x1280xf32, #tpu.memory_space<vmem>>, vector<32x16xf32>
    %cst_82 = arith.constant dense<0.000000e+00> : vector<8x16xf32>
    %194 = tpu.matmul %191, %193, %cst_82 {dimension_numbers = #tpu.dot_dimension_numbers<[1], [0], [0], [1], [0, 0, 1, 1], [], []>} : vector<8x32xf32>, vector<32x16xf32>, vector<8x16xf32> -> vector<8x16xf32>
    %195 = vector.extract_strided_slice %192 {offsets = [0, 0], sizes = [1, 16], strides = [1, 1]} : vector<3x16xf32> to vector<1x16xf32>
    %196 = vector.broadcast %195 : vector<1x16xf32> to vector<8x16xf32>
    %197 = arith.addf %194, %196 : vector<8x16xf32>
    %cst_83 = arith.constant 5.000000e-01 : f32
    %198 = vector.broadcast %cst_83 : f32 to vector<8x16xf32>
    %199 = arith.mulf %198, %197 : vector<8x16xf32>
    %200 = math.tanh %199 : vector<8x16xf32>
    %cst_84 = arith.constant 1.000000e+00 : f32
    %201 = vector.broadcast %cst_84 : f32 to vector<8x16xf32>
    %202 = arith.addf %200, %201 : vector<8x16xf32>
    %203 = arith.mulf %199, %202 : vector<8x16xf32>
    %204 = vector.extract_strided_slice %192 {offsets = [1, 0], sizes = [1, 16], strides = [1, 1]} : vector<3x16xf32> to vector<1x16xf32>
    %205 = vector.extract_strided_slice %192 {offsets = [2, 0], sizes = [1, 16], strides = [1, 1]} : vector<3x16xf32> to vector<1x16xf32>
    %cst_85 = arith.constant dense<0.000000e+00> : vector<16xf32>
    %206 = vector.multi_reduction <add>, %203, %cst_85 [0] : vector<8x16xf32> to vector<16xf32>
    %207 = vector.shape_cast %206 : vector<16xf32> to vector<1x16xf32>
    %cst_86 = arith.constant 8.000000e+00 : f32
    %208 = vector.broadcast %cst_86 : f32 to vector<1x16xf32>
    %209 = arith.divf %207, %208 : vector<1x16xf32>
    %210 = vector.broadcast %209 : vector<1x16xf32> to vector<8x16xf32>
    %211 = arith.subf %203, %210 : vector<8x16xf32>
    %212 = arith.mulf %211, %211 : vector<8x16xf32>
    %cst_87 = arith.constant dense<0.000000e+00> : vector<16xf32>
    %213 = vector.multi_reduction <add>, %212, %cst_87 [0] : vector<8x16xf32> to vector<16xf32>
    %214 = vector.shape_cast %213 : vector<16xf32> to vector<1x16xf32>
    %cst_88 = arith.constant 8.000000e+00 : f32
    %215 = vector.broadcast %cst_88 : f32 to vector<1x16xf32>
    %216 = arith.divf %214, %215 : vector<1x16xf32>
    %cst_89 = arith.constant 9.99999974E-6 : f32
    %217 = vector.broadcast %cst_89 : f32 to vector<1x16xf32>
    %218 = arith.addf %216, %217 : vector<1x16xf32>
    %219 = math.rsqrt %218 : vector<1x16xf32>
    %220 = arith.mulf %204, %219 : vector<1x16xf32>
    %221 = vector.broadcast %220 : vector<1x16xf32> to vector<8x16xf32>
    %222 = arith.mulf %211, %221 : vector<8x16xf32>
    %223 = vector.broadcast %205 : vector<1x16xf32> to vector<8x16xf32>
    %224 = arith.addf %222, %223 : vector<8x16xf32>
    %c0_90 = arith.constant 0 : index
    %c640_91 = arith.constant 640 : index
    %225 = vector.load %arg5[%c0_90, %c640_91] : memref<64x1280xf32, #tpu.memory_space<vmem>>, vector<16x16xf32>
    %cst_92 = arith.constant dense<0.000000e+00> : vector<8x16xf32>
    %226 = tpu.matmul %224, %225, %cst_92 {dimension_numbers = #tpu.dot_dimension_numbers<[1], [0], [0], [1], [0, 0, 1, 1], [], []>} : vector<8x16xf32>, vector<16x16xf32>, vector<8x16xf32> -> vector<8x16xf32>
    %c0_93 = arith.constant 0 : index
    %c1024 = arith.constant 1024 : index
    %227 = vector.load %arg6[%c0_93, %c1024] : memref<3x1408xf32, #tpu.memory_space<vmem>>, vector<1x16xf32>
    %228 = vector.broadcast %227 : vector<1x16xf32> to vector<8x16xf32>
    %229 = arith.addf %226, %228 : vector<8x16xf32>
    %cst_94 = arith.constant 5.000000e-01 : f32
    %230 = vector.broadcast %cst_94 : f32 to vector<8x16xf32>
    %231 = arith.mulf %230, %229 : vector<8x16xf32>
    %232 = math.tanh %231 : vector<8x16xf32>
    %cst_95 = arith.constant 1.000000e+00 : f32
    %233 = vector.broadcast %cst_95 : f32 to vector<8x16xf32>
    %234 = arith.addf %232, %233 : vector<8x16xf32>
    %235 = arith.mulf %231, %234 : vector<8x16xf32>
    %c0_96 = arith.constant 0 : index
    %c1152 = arith.constant 1152 : index
    %236 = vector.load %arg6[%c0_96, %c1152] : memref<3x1408xf32, #tpu.memory_space<vmem>>, vector<3x64xf32>
    %c0_97 = arith.constant 0 : index
    %c0_98 = arith.constant 0 : index
    %237 = vector.load %arg0[%c0_97, %c0_98] : memref<8x9xf32, #tpu.memory_space<vmem>>, vector<8x9xf32>
    %c0_99 = arith.constant 0 : index
    %c768_100 = arith.constant 768 : index
    %238 = vector.load %arg5[%c0_99, %c768_100] : memref<64x1280xf32, #tpu.memory_space<vmem>>, vector<9x64xf32>
    %cst_101 = arith.constant dense<0.000000e+00> : vector<8x64xf32>
    %239 = tpu.matmul %237, %238, %cst_101 {dimension_numbers = #tpu.dot_dimension_numbers<[1], [0], [0], [1], [0, 0, 1, 1], [], []>} : vector<8x9xf32>, vector<9x64xf32>, vector<8x64xf32> -> vector<8x64xf32>
    %c0_102 = arith.constant 0 : index
    %c896_103 = arith.constant 896 : index
    %240 = vector.load %arg5[%c0_102, %c896_103] : memref<64x1280xf32, #tpu.memory_space<vmem>>, vector<3x64xf32>
    %cst_104 = arith.constant dense<0.000000e+00> : vector<8x64xf32>
    %241 = tpu.matmul %157, %240, %cst_104 {dimension_numbers = #tpu.dot_dimension_numbers<[1], [0], [0], [1], [0, 0, 1, 1], [], []>} : vector<8x3xf32>, vector<3x64xf32>, vector<8x64xf32> -> vector<8x64xf32>
    %242 = arith.addf %239, %241 : vector<8x64xf32>
    %c0_105 = arith.constant 0 : index
    %c1024_106 = arith.constant 1024 : index
    %243 = vector.load %arg5[%c0_105, %c1024_106] : memref<64x1280xf32, #tpu.memory_space<vmem>>, vector<16x64xf32>
    %cst_107 = arith.constant dense<0.000000e+00> : vector<8x64xf32>
    %244 = tpu.matmul %235, %243, %cst_107 {dimension_numbers = #tpu.dot_dimension_numbers<[1], [0], [0], [1], [0, 0, 1, 1], [], []>} : vector<8x16xf32>, vector<16x64xf32>, vector<8x64xf32> -> vector<8x64xf32>
    %245 = arith.addf %242, %244 : vector<8x64xf32>
    %246 = vector.extract_strided_slice %236 {offsets = [0, 0], sizes = [1, 64], strides = [1, 1]} : vector<3x64xf32> to vector<1x64xf32>
    %247 = vector.broadcast %246 : vector<1x64xf32> to vector<8x64xf32>
    %248 = arith.addf %245, %247 : vector<8x64xf32>
    %cst_108 = arith.constant 5.000000e-01 : f32
    %249 = vector.broadcast %cst_108 : f32 to vector<8x64xf32>
    %250 = arith.mulf %249, %248 : vector<8x64xf32>
    %251 = math.tanh %250 : vector<8x64xf32>
    %cst_109 = arith.constant 1.000000e+00 : f32
    %252 = vector.broadcast %cst_109 : f32 to vector<8x64xf32>
    %253 = arith.addf %251, %252 : vector<8x64xf32>
    %254 = arith.mulf %250, %253 : vector<8x64xf32>
    %255 = vector.extract_strided_slice %236 {offsets = [1, 0], sizes = [1, 64], strides = [1, 1]} : vector<3x64xf32> to vector<1x64xf32>
    %256 = vector.extract_strided_slice %236 {offsets = [2, 0], sizes = [1, 64], strides = [1, 1]} : vector<3x64xf32> to vector<1x64xf32>
    %cst_110 = arith.constant dense<0.000000e+00> : vector<64xf32>
    %257 = vector.multi_reduction <add>, %254, %cst_110 [0] : vector<8x64xf32> to vector<64xf32>
    %258 = vector.shape_cast %257 : vector<64xf32> to vector<1x64xf32>
    %cst_111 = arith.constant 8.000000e+00 : f32
    %259 = vector.broadcast %cst_111 : f32 to vector<1x64xf32>
    %260 = arith.divf %258, %259 : vector<1x64xf32>
    %261 = vector.broadcast %260 : vector<1x64xf32> to vector<8x64xf32>
    %262 = arith.subf %254, %261 : vector<8x64xf32>
    %263 = arith.mulf %262, %262 : vector<8x64xf32>
    %cst_112 = arith.constant dense<0.000000e+00> : vector<64xf32>
    %264 = vector.multi_reduction <add>, %263, %cst_112 [0] : vector<8x64xf32> to vector<64xf32>
    %265 = vector.shape_cast %264 : vector<64xf32> to vector<1x64xf32>
    %cst_113 = arith.constant 8.000000e+00 : f32
    %266 = vector.broadcast %cst_113 : f32 to vector<1x64xf32>
    %267 = arith.divf %265, %266 : vector<1x64xf32>
    %cst_114 = arith.constant 9.99999974E-6 : f32
    %268 = vector.broadcast %cst_114 : f32 to vector<1x64xf32>
    %269 = arith.addf %267, %268 : vector<1x64xf32>
    %270 = math.rsqrt %269 : vector<1x64xf32>
    %271 = arith.mulf %255, %270 : vector<1x64xf32>
    %272 = vector.broadcast %271 : vector<1x64xf32> to vector<8x64xf32>
    %273 = arith.mulf %262, %272 : vector<8x64xf32>
    %274 = vector.broadcast %256 : vector<1x64xf32> to vector<8x64xf32>
    %275 = arith.addf %273, %274 : vector<8x64xf32>
    %c0_115 = arith.constant 0 : index
    %c1280 = arith.constant 1280 : index
    %276 = vector.load %arg6[%c0_115, %c1280] : memref<3x1408xf32, #tpu.memory_space<vmem>>, vector<3x128xf32>
    %c0_116 = arith.constant 0 : index
    %c1152_117 = arith.constant 1152 : index
    %277 = vector.load %arg5[%c0_116, %c1152_117] : memref<64x1280xf32, #tpu.memory_space<vmem>>, vector<64x128xf32>
    %cst_118 = arith.constant dense<0.000000e+00> : vector<8x128xf32>
    %278 = tpu.matmul %275, %277, %cst_118 {dimension_numbers = #tpu.dot_dimension_numbers<[1], [0], [0], [1], [0, 0, 1, 1], [], []>} : vector<8x64xf32>, vector<64x128xf32>, vector<8x128xf32> -> vector<8x128xf32>
    %279 = vector.extract_strided_slice %276 {offsets = [0, 0], sizes = [1, 128], strides = [1, 1]} : vector<3x128xf32> to vector<1x128xf32>
    %280 = vector.broadcast %279 : vector<1x128xf32> to vector<8x128xf32>
    %281 = arith.addf %278, %280 : vector<8x128xf32>
    %cst_119 = arith.constant 5.000000e-01 : f32
    %282 = vector.broadcast %cst_119 : f32 to vector<8x128xf32>
    %283 = arith.mulf %282, %281 : vector<8x128xf32>
    %284 = math.tanh %283 : vector<8x128xf32>
    %cst_120 = arith.constant 1.000000e+00 : f32
    %285 = vector.broadcast %cst_120 : f32 to vector<8x128xf32>
    %286 = arith.addf %284, %285 : vector<8x128xf32>
    %287 = arith.mulf %283, %286 : vector<8x128xf32>
    %288 = vector.extract_strided_slice %276 {offsets = [1, 0], sizes = [1, 128], strides = [1, 1]} : vector<3x128xf32> to vector<1x128xf32>
    %289 = vector.extract_strided_slice %276 {offsets = [2, 0], sizes = [1, 128], strides = [1, 1]} : vector<3x128xf32> to vector<1x128xf32>
    %cst_121 = arith.constant dense<0.000000e+00> : vector<128xf32>
    %290 = vector.multi_reduction <add>, %287, %cst_121 [0] : vector<8x128xf32> to vector<128xf32>
    %291 = vector.shape_cast %290 : vector<128xf32> to vector<1x128xf32>
    %cst_122 = arith.constant 8.000000e+00 : f32
    %292 = vector.broadcast %cst_122 : f32 to vector<1x128xf32>
    %293 = arith.divf %291, %292 : vector<1x128xf32>
    %294 = vector.broadcast %293 : vector<1x128xf32> to vector<8x128xf32>
    %295 = arith.subf %287, %294 : vector<8x128xf32>
    %296 = arith.mulf %295, %295 : vector<8x128xf32>
    %cst_123 = arith.constant dense<0.000000e+00> : vector<128xf32>
    %297 = vector.multi_reduction <add>, %296, %cst_123 [0] : vector<8x128xf32> to vector<128xf32>
    %298 = vector.shape_cast %297 : vector<128xf32> to vector<1x128xf32>
    %cst_124 = arith.constant 8.000000e+00 : f32
    %299 = vector.broadcast %cst_124 : f32 to vector<1x128xf32>
    %300 = arith.divf %298, %299 : vector<1x128xf32>
    %cst_125 = arith.constant 9.99999974E-6 : f32
    %301 = vector.broadcast %cst_125 : f32 to vector<1x128xf32>
    %302 = arith.addf %300, %301 : vector<1x128xf32>
    %303 = math.rsqrt %302 : vector<1x128xf32>
    %304 = arith.mulf %288, %303 : vector<1x128xf32>
    %305 = vector.broadcast %304 : vector<1x128xf32> to vector<8x128xf32>
    %306 = arith.mulf %295, %305 : vector<8x128xf32>
    %307 = vector.broadcast %289 : vector<1x128xf32> to vector<8x128xf32>
    %308 = arith.addf %306, %307 : vector<8x128xf32>
    %c0_126 = arith.constant 0 : index
    %c0_127 = arith.constant 0 : index
    %309 = vector.load %arg7[%c0_126, %c0_127] : memref<8x128xf32, #tpu.memory_space<vmem>>, vector<8x128xf32>
    tpu.vector_store %arg7[%c0_126, %c0_127], %308 {strides = array<i32>} : memref<8x128xf32, #tpu.memory_space<vmem>>, vector<8x128xf32>,
    return
  }
}

</mosaic_0001>

<llo_original>
// kernel: bid_predictor_forward.1
$region0: #{bid_predictor_forward.1}
  #allocation0 [shape = 'u32[]', space=smem, size = 0x4, offset = 0x4, fixed_abs, tag = 'smem constant byte address 0x4 - core index']
  #allocation1 [shape = 'u32[144,128]{1,0:T(1,128)}', space=vmem, size = 0x12000, scoped, tag = 'internal scratch']
  #allocation2 [shape = 'f32[2,8,768]{2,1,0:T(8,128)}', space=vmem, size = 0xc000, scoped, tag = 'scratch operand']
  #allocation3 [shape = 's32[2]{0}', space=sflag, size = 0x8, scoped, tag = 'scratch operand']
  #allocation4 [shape = 'f32[8,192]{1,0:T(8,128)}', space=vmem, size = 0x2000, scoped, tag = 'scratch operand']
  #allocation7 [shape = 's32[]', space=sflag, size = 0x4, offset = 0, fixed_abs, tag = 'sflag constant byte address 0x0 - dummy sync flag']
  %s0 = inlined_call_operand.vmem [shape: f32[8,9], index: 0, kind: input, shape index: {}]
  %s1 = inlined_call_operand.vmem [shape: f32[8,768], index: 1, kind: input, shape index: {}]
  %s2 = inlined_call_operand.vmem [shape: f32[8,44], index: 2, kind: input, shape index: {}]
  %s3 = inlined_call_operand.vmem [shape: bf16[768,192], index: 3, kind: input, shape index: {}]
  %s4 = inlined_call_operand.vmem [shape: f32[192,48], index: 4, kind: input, shape index: {}]
  %s5 = inlined_call_operand.vmem [shape: f32[64,1280], index: 5, kind: input, shape index: {}]
  %s6 = inlined_call_operand.vmem [shape: f32[3,1408], index: 6, kind: input, shape index: {}]
  %s7 = inlined_call_operand.hbm [shape: f32[8,128], index: 7, kind: output, shape index: {}]
  %s8 = sld [smem:[#allocation0]]
  $region68: #{bid_predictor_forward.1} parent=0
    _
  %s10 = ssub.s32 1, %s8
  %s11 = scalar_select 0, %s10, %s8
  $region1: #{bid_predictor_forward.1} parent=0
    #allocation5 [shape = 'u8[4096]{0}', space=vmem, size = 0x1000, scoped, tag = 'output window, operand 0, single buffered']
    #allocation6 [shape = 's32[1]{0}', space=sflag, size = 0x4, scoped, tag = 'scoped memory for bid_predictor_forward.1']
    %12 = vsyncpa [#allocation6], 0
    // Predicated region
    $region2: #{bid_predictor_forward.1} parent=1 // pred_check
      _
    $region3: #{bid_predictor_forward.1} parent=1 // pred_check_branch
      %14 = sbr.rel (0) target = $region5
    $region4: #{bid_predictor_forward.1} parent=1 // pred_region
      _
    $region5: #{bid_predictor_forward.1} parent=1 // pred_fallthru
      _
    // Predicated region
    $region6: #{bid_predictor_forward.1} parent=1 // pred_check
      _
    $region7: #{bid_predictor_forward.1} parent=1 // pred_check_branch
      %16 = sbr.rel (0) target = $region9
    $region8: #{bid_predictor_forward.1} parent=1 // pred_region
      _
    $region9: #{bid_predictor_forward.1} parent=1 // pred_fallthru
      _
    // Predicated region
    $region10: #{bid_predictor_forward.1} parent=1 // pred_check
      _
    $region11: #{bid_predictor_forward.1} parent=1 // pred_check_branch
      %18 = sbr.rel (0) target = $region13
    $region12: #{bid_predictor_forward.1} parent=1 // pred_region
      _
    $region13: #{bid_predictor_forward.1} parent=1 // pred_fallthru
      _
    // Predicated region
    $region14: #{bid_predictor_forward.1} parent=1 // pred_check
      _
    $region15: #{bid_predictor_forward.1} parent=1 // pred_check_branch
      %20 = sbr.rel (0) target = $region17
    $region16: #{bid_predictor_forward.1} parent=1 // pred_region
      _
    $region17: #{bid_predictor_forward.1} parent=1 // pred_fallthru
      _
    // Predicated region
    $region18: #{bid_predictor_forward.1} parent=1 // pred_check
      _
    $region19: #{bid_predictor_forward.1} parent=1 // pred_check_branch
      %22 = sbr.rel (0) target = $region21
    $region20: #{bid_predictor_forward.1} parent=1 // pred_region
      _
    $region21: #{bid_predictor_forward.1} parent=1 // pred_fallthru
      _
    // Predicated region
    $region22: #{bid_predictor_forward.1} parent=1 // pred_check
      _
    $region23: #{bid_predictor_forward.1} parent=1 // pred_check_branch
      %24 = sbr.rel (0) target = $region25
    $region24: #{bid_predictor_forward.1} parent=1 // pred_region
      _
    $region25: #{bid_predictor_forward.1} parent=1 // pred_fallthru
      _
    %p26 = scmp.lt.u32.totalorder 48, 8
    %p27 = pneg %p26
    // Predicated region
    $region26: #{bid_predictor_forward.1} parent=1 // pred_check
      _
    $region27: #{bid_predictor_forward.1} parent=1 // pred_check_branch
      %29 = sbr.rel (%p26) target = $region29
    $region28: #{bid_predictor_forward.1} parent=1 // pred_region
      %s45 = sand.u32 48, 7
      %p46 = scmp.eq.s32.totalorder %s45, 0
      // Predicated region
      $region41: #{bid_predictor_forward.1} parent=28 // pred_check
        %p47 = pneg %p46
      $region42: #{bid_predictor_forward.1} parent=28 // pred_check_branch
        %49 = sbr.rel (%p47) target = $region44
      $region43: #{bid_predictor_forward.1} parent=28 // pred_region
        loop: start=0, step=1, limit=1
        $region45: #{bid_predictor_forward.1} parent=43 // loop_pre_header
          _
        $region46: #{bid_predictor_forward.1} parent=43 // loop_header
          %s51 = sphi 0, %s55
          %p52 = scmp.ge.s32.totalorder %s51, 1
          %s56 = sphi %s1, %s1
          %s57 = sphi [#allocation2], [#allocation2]
        $region47: #{bid_predictor_forward.1} parent=43 // loop_header_branch
          %54 = sbr.rel (%p52) target = $region51
        $region48: #{bid_predictor_forward.1} parent=43 // loop_body
          %v58 = vld [vmem:[%s56] sm:$0xff]
          %59 = vst [vmem:[%s57] sm:$0xff] %v58
          %v60 = vld [vmem:[%s56 + $0x8] sm:$0xff]
          %61 = vst [vmem:[%s57 + $0x8] sm:$0xff] %v60
          %v62 = vld [vmem:[%s56 + $0x10] sm:$0xff]
          %63 = vst [vmem:[%s57 + $0x10] sm:$0xff] %v62
          %v64 = vld [vmem:[%s56 + $0x18] sm:$0xff]
          %65 = vst [vmem:[%s57 + $0x18] sm:$0xff] %v64
          %v66 = vld [vmem:[%s56 + $0x20] sm:$0xff]
          %67 = vst [vmem:[%s57 + $0x20] sm:$0xff] %v66
          %v68 = vld [vmem:[%s56 + $0x28] sm:$0xff]
          %69 = vst [vmem:[%s57 + $0x28] sm:$0xff] %v68
        $region49: #{bid_predictor_forward.1} parent=43 // loop_footer
          %s55 = sadd.s32 1, %s51
        $region50: #{bid_predictor_forward.1} parent=43 // loop_footer_branch
          %50 = sbr.rel target = $region46
        $region51: #{bid_predictor_forward.1} parent=43 // loop_exit
          _
      $region44: #{bid_predictor_forward.1} parent=28 // pred_fallthru
        _
      %p70 = pneg %p46
      // Predicated region
      $region52: #{bid_predictor_forward.1} parent=28 // pred_check
        _
      $region53: #{bid_predictor_forward.1} parent=28 // pred_check_branch
        %72 = sbr.rel (%p46) target = $region55
      $region54: #{bid_predictor_forward.1} parent=28 // pred_region
        %s73 = sand.u32 48, 7
      $region55: #{bid_predictor_forward.1} parent=28 // pred_fallthru
        _
    $region29: #{bid_predictor_forward.1} parent=1 // pred_fallthru
      _
    // Predicated region
    $region30: #{bid_predictor_forward.1} parent=1 // pred_check
      %p30 = pneg %p26
    $region31: #{bid_predictor_forward.1} parent=1 // pred_check_branch
      %32 = sbr.rel (%p30) target = $region33
    $region32: #{bid_predictor_forward.1} parent=1 // pred_region
      %s33 = sshll.u32 1, 48
      %s34 = ssub.s32 %s33, 1
      loop: start=0, step=1, limit=1
      $region34: #{bid_predictor_forward.1} parent=32 // loop_pre_header
        _
      $region35: #{bid_predictor_forward.1} parent=32 // loop_header
        %s36 = sphi 0, %s40
        %p37 = scmp.ge.s32.totalorder %s36, 1
        %s41 = sphi %s1, %s1
        %s42 = sphi [#allocation2], [#allocation2]
      $region36: #{bid_predictor_forward.1} parent=32 // loop_header_branch
        %39 = sbr.rel (%p37) target = $region40
      $region37: #{bid_predictor_forward.1} parent=32 // loop_body
        %v43 = vld [vmem:[%s41] sm:%s34]
        %44 = vst [vmem:[%s42] sm:%s34] %v43
      $region38: #{bid_predictor_forward.1} parent=32 // loop_footer
        %s40 = sadd.s32 1, %s36
      $region39: #{bid_predictor_forward.1} parent=32 // loop_footer_branch
        %35 = sbr.rel target = $region35
      $region40: #{bid_predictor_forward.1} parent=32 // loop_exit
        _
    $region33: #{bid_predictor_forward.1} parent=1 // pred_fallthru
      _
    // Predicated region
    $region56: #{bid_predictor_forward.1} parent=1 // pred_check
      _
    $region57: #{bid_predictor_forward.1} parent=1 // pred_check_branch
      %76 = sbr.rel (0) target = $region59
    $region58: #{bid_predictor_forward.1} parent=1 // pred_region
      %77 = vsyncadd [#allocation3], 768
    $region59: #{bid_predictor_forward.1} parent=1 // pred_fallthru
      _
    %v78 = vld [vmem:[%s3] sm:$0xff]
    %v79 = vld [vmem:[%s3 + $0x8] sm:$0xff]
    %v80 = vld [vmem:[%s3 + $0x10] sm:$0xff]
    %v81 = vld [vmem:[%s3 + $0x18] sm:$0xff]
    %v82 = vld [vmem:[%s3 + $0x20] sm:$0xff]
    %v83 = vld [vmem:[%s3 + $0x28] sm:$0xff]
    %v84 = vld [vmem:[%s3 + $0x30] sm:$0xff]
    %v85 = vld [vmem:[%s3 + $0x38] sm:$0xff]
    %v86 = vld [vmem:[%s3 + $0x40] sm:$0xff]
    %v87 = vld [vmem:[%s3 + $0x48] sm:$0xff]
    %v88 = vld [vmem:[%s3 + $0x50] sm:$0xff]
    %v89 = vld [vmem:[%s3 + $0x58] sm:$0xff]
    %v90 = vld [vmem:[%s3 + $0x60] sm:$0xff]
    %v91 = vld [vmem:[%s3 + $0x68] sm:$0xff]
    %v92 = vld [vmem:[%s3 + $0x70] sm:$0xff]
    %v93 = vld [vmem:[%s3 + $0x78] sm:$0xff]
    %v94 = vld [vmem:[%s3 + $0x80] sm:$0xff]
    %v95 = vld [vmem:[%s3 + $0x88] sm:$0xff]
    %v96 = vld [vmem:[%s3 + $0x90] sm:$0xff]
    %v97 = vld [vmem:[%s3 + $0x98] sm:$0xff]
    %v98 = vld [vmem:[%s3 + $0xa0] sm:$0xff]
    %v99 = vld [vmem:[%s3 + $0xa8] sm:$0xff]
    %v100 = vld [vmem:[%s3 + $0xb0] sm:$0xff]
    %v101 = vld [vmem:[%s3 + $0xb8] sm:$0xff]
    %v102 = vld [vmem:[%s3 + $0xc0] sm:$0xff]
    %v103 = vld [vmem:[%s3 + $0xc8] sm:$0xff]
    %v104 = vld [vmem:[%s3 + $0xd0] sm:$0xff]
    %v105 = vld [vmem:[%s3 + $0xd8] sm:$0xff]
    %v106 = vld [vmem:[%s3 + $0xe0] sm:$0xff]
    %v107 = vld [vmem:[%s3 + $0xe8] sm:$0xff]
    %v108 = vld [vmem:[%s3 + $0xf0] sm:$0xff]
    %v109 = vld [vmem:[%s3 + $0xf8] sm:$0xff]
    %v110 = vld [vmem:[%s3 + $0x100] sm:$0xff]
    %v111 = vld [vmem:[%s3 + $0x108] sm:$0xff]
    %v112 = vld [vmem:[%s3 + $0x110] sm:$0xff]
    %v113 = vld [vmem:[%s3 + $0x118] sm:$0xff]
    %v114 = vld [vmem:[%s3 + $0x120] sm:$0xff]
    %v115 = vld [vmem:[%s3 + $0x128] sm:$0xff]
    %v116 = vld [vmem:[%s3 + $0x130] sm:$0xff]
    %v117 = vld [vmem:[%s3 + $0x138] sm:$0xff]
    %v118 = vld [vmem:[%s3 + $0x140] sm:$0xff]
    %v119 = vld [vmem:[%s3 + $0x148] sm:$0xff]
    %v120 = vld [vmem:[%s3 + $0x150] sm:$0xff]
    %v121 = vld [vmem:[%s3 + $0x158] sm:$0xff]
    %v122 = vld [vmem:[%s3 + $0x160] sm:$0xff]
    %v123 = vld [vmem:[%s3 + $0x168] sm:$0xff]
    %v124 = vld [vmem:[%s3 + $0x170] sm:$0xff]
    %v125 = vld [vmem:[%s3 + $0x178] sm:$0xff]
    %v126 = vld [vmem:[%s3 + $0x180] sm:$0xff]
    %v127 = vld [vmem:[%s3 + $0x188] sm:$0xff]
    %v128 = vld [vmem:[%s3 + $0x190] sm:$0xff]
    %v129 = vld [vmem:[%s3 + $0x198] sm:$0xff]
    %v130 = vld [vmem:[%s3 + $0x1a0] sm:$0xff]
    %v131 = vld [vmem:[%s3 + $0x1a8] sm:$0xff]
    %v132 = vld [vmem:[%s3 + $0x1b0] sm:$0xff]
    %v133 = vld [vmem:[%s3 + $0x1b8] sm:$0xff]
    %v134 = vld [vmem:[%s3 + $0x1c0] sm:$0xff]
    %v135 = vld [vmem:[%s3 + $0x1c8] sm:$0xff]
    %v136 = vld [vmem:[%s3 + $0x1d0] sm:$0xff]
    %v137 = vld [vmem:[%s3 + $0x1d8] sm:$0xff]
    %v138 = vld [vmem:[%s3 + $0x1e0] sm:$0xff]
    %v139 = vld [vmem:[%s3 + $0x1e8] sm:$0xff]
    %v140 = vld [vmem:[%s3 + $0x1f0] sm:$0xff]
    %v141 = vld [vmem:[%s3 + $0x1f8] sm:$0xff]
    %v142 = vld [vmem:[%s3 + $0x200] sm:$0xff]
    %v143 = vld [vmem:[%s3 + $0x208] sm:$0xff]
    %v144 = vld [vmem:[%s3 + $0x210] sm:$0xff]
    %v145 = vld [vmem:[%s3 + $0x218] sm:$0xff]
    %v146 = vld [vmem:[%s3 + $0x220] sm:$0xff]
    %v147 = vld [vmem:[%s3 + $0x228] sm:$0xff]
    %v148 = vld [vmem:[%s3 + $0x230] sm:$0xff]
    %v149 = vld [vmem:[%s3 + $0x238] sm:$0xff]
    %v150 = vld [vmem:[%s3 + $0x240] sm:$0xff]
    %v151 = vld [vmem:[%s3 + $0x248] sm:$0xff]
    %v152 = vld [vmem:[%s3 + $0x250] sm:$0xff]
    %v153 = vld [vmem:[%s3 + $0x258] sm:$0xff]
    %v154 = vld [vmem:[%s3 + $0x260] sm:$0xff]
    %v155 = vld [vmem:[%s3 + $0x268] sm:$0xff]
    %v156 = vld [vmem:[%s3 + $0x270] sm:$0xff]
    %v157 = vld [vmem:[%s3 + $0x278] sm:$0xff]
    %v158 = vld [vmem:[%s3 + $0x280] sm:$0xff]
    %v159 = vld [vmem:[%s3 + $0x288] sm:$0xff]
    %v160 = vld [vmem:[%s3 + $0x290] sm:$0xff]
    %v161 = vld [vmem:[%s3 + $0x298] sm:$0xff]
    %v162 = vld [vmem:[%s3 + $0x2a0] sm:$0xff]
    %v163 = vld [vmem:[%s3 + $0x2a8] sm:$0xff]
    %v164 = vld [vmem:[%s3 + $0x2b0] sm:$0xff]
    %v165 = vld [vmem:[%s3 + $0x2b8] sm:$0xff]
    %v166 = vld [vmem:[%s3 + $0x2c0] sm:$0xff]
    %v167 = vld [vmem:[%s3 + $0x2c8] sm:$0xff]
    %v168 = vld [vmem:[%s3 + $0x2d0] sm:$0xff]
    %v169 = vld [vmem:[%s3 + $0x2d8] sm:$0xff]
    %v170 = vld [vmem:[%s3 + $0x2e0] sm:$0xff]
    %v171 = vld [vmem:[%s3 + $0x2e8] sm:$0xff]
    %v172 = vld [vmem:[%s3 + $0x2f0] sm:$0xff]
    %v173 = vld [vmem:[%s3 + $0x2f8] sm:$0xff]
    %s174 = smul.u32 8, 1
    %s175 = smul.u32 %s174, 6
    %s176 = sshll.u32 %s175, 4
    %177 = dma.done [#allocation3], %s176
    %v178 = vld [vmem:[#allocation2] sm:$0xff]
    %v179 = vld [vmem:[#allocation2 + $0x8] sm:$0xff]
    %v180 = vld [vmem:[#allocation2 + $0x10] sm:$0xff]
    %v181 = vld [vmem:[#allocation2 + $0x18] sm:$0xff]
    %v182 = vld [vmem:[#allocation2 + $0x20] sm:$0xff]
    %v183 = vld [vmem:[#allocation2 + $0x28] sm:$0xff]
    %v184 = vpack.c.bf16 %v178, %v178
    %v185 = vpack.c.bf16 %v179, %v179
    %v186 = vpack.c.bf16 %v180, %v180
    %v187 = vpack.c.bf16 %v181, %v181
    %v188 = vpack.c.bf16 %v182, %v182
    %v189 = vpack.c.bf16 %v183, %v183
    %v286 = vunpack.c.l.b16 %v78
    %v287 = vunpack.c.h.b16 %v78
    %v288 = vunpack.c.l.b16 %v79
    %v289 = vunpack.c.h.b16 %v79
    %v290 = vunpack.c.l.b16 %v80
    %v291 = vunpack.c.h.b16 %v80
    %v292 = vunpack.c.l.b16 %v81
    %v293 = vunpack.c.h.b16 %v81
    %v294 = vunpack.c.l.b16 %v82
    %v295 = vunpack.c.h.b16 %v82
    %v296 = vunpack.c.l.b16 %v83
    %v297 = vunpack.c.h.b16 %v83
    %v298 = vunpack.c.l.b16 %v84
    %v299 = vunpack.c.h.b16 %v84
    %v300 = vunpack.c.l.b16 %v85
    %v301 = vunpack.c.h.b16 %v85
    %v302 = vunpack.c.l.b16 %v86
    %v303 = vunpack.c.h.b16 %v86
    %v304 = vunpack.c.l.b16 %v87
    %v305 = vunpack.c.h.b16 %v87
    %v306 = vunpack.c.l.b16 %v88
    %v307 = vunpack.c.h.b16 %v88
    %v308 = vunpack.c.l.b16 %v89
    %v309 = vunpack.c.h.b16 %v89
    %v310 = vunpack.c.l.b16 %v90
    %v311 = vunpack.c.h.b16 %v90
    %v312 = vunpack.c.l.b16 %v91
    %v313 = vunpack.c.h.b16 %v91
    %v314 = vunpack.c.l.b16 %v92
    %v315 = vunpack.c.h.b16 %v92
    %v316 = vunpack.c.l.b16 %v93
    %v317 = vunpack.c.h.b16 %v93
    %v318 = vunpack.c.l.b16 %v94
    %v319 = vunpack.c.h.b16 %v94
    %v320 = vunpack.c.l.b16 %v95
    %v321 = vunpack.c.h.b16 %v95
    %v322 = vunpack.c.l.b16 %v96
    %v323 = vunpack.c.h.b16 %v96
    %v324 = vunpack.c.l.b16 %v97
    %v325 = vunpack.c.h.b16 %v97
    %v326 = vunpack.c.l.b16 %v98
    %v327 = vunpack.c.h.b16 %v98
    %v328 = vunpack.c.l.b16 %v99
    %v329 = vunpack.c.h.b16 %v99
    %v330 = vunpack.c.l.b16 %v100
    %v331 = vunpack.c.h.b16 %v100
    %v332 = vunpack.c.l.b16 %v101
    %v333 = vunpack.c.h.b16 %v101
    %v334 = vunpack.c.l.b16 %v102
    %v335 = vunpack.c.h.b16 %v102
    %v336 = vunpack.c.l.b16 %v103
    %v337 = vunpack.c.h.b16 %v103
    %v338 = vunpack.c.l.b16 %v104
    %v339 = vunpack.c.h.b16 %v104
    %v340 = vunpack.c.l.b16 %v105
    %v341 = vunpack.c.h.b16 %v105
    %v342 = vunpack.c.l.b16 %v106
    %v343 = vunpack.c.h.b16 %v106
    %v344 = vunpack.c.l.b16 %v107
    %v345 = vunpack.c.h.b16 %v107
    %v346 = vunpack.c.l.b16 %v108
    %v347 = vunpack.c.h.b16 %v108
    %v348 = vunpack.c.l.b16 %v109
    %v349 = vunpack.c.h.b16 %v109
    %v350 = vunpack.c.l.b16 %v110
    %v351 = vunpack.c.h.b16 %v110
    %v352 = vunpack.c.l.b16 %v111
    %v353 = vunpack.c.h.b16 %v111
    %v354 = vunpack.c.l.b16 %v112
    %v355 = vunpack.c.h.b16 %v112
    %v356 = vunpack.c.l.b16 %v113
    %v357 = vunpack.c.h.b16 %v113
    %v358 = vunpack.c.l.b16 %v114
    %v359 = vunpack.c.h.b16 %v114
    %v360 = vunpack.c.l.b16 %v115
    %v361 = vunpack.c.h.b16 %v115
    %v362 = vunpack.c.l.b16 %v116
    %v363 = vunpack.c.h.b16 %v116
    %v364 = vunpack.c.l.b16 %v117
    %v365 = vunpack.c.h.b16 %v117
    %v366 = vunpack.c.l.b16 %v118
    %v367 = vunpack.c.h.b16 %v118
    %v368 = vunpack.c.l.b16 %v119
    %v369 = vunpack.c.h.b16 %v119
    %v370 = vunpack.c.l.b16 %v120
    %v371 = vunpack.c.h.b16 %v120
    %v372 = vunpack.c.l.b16 %v121
    %v373 = vunpack.c.h.b16 %v121
    %v374 = vunpack.c.l.b16 %v122
    %v375 = vunpack.c.h.b16 %v122
    %v376 = vunpack.c.l.b16 %v123
    %v377 = vunpack.c.h.b16 %v123
    %v378 = vunpack.c.l.b16 %v124
    %v379 = vunpack.c.h.b16 %v124
    %v380 = vunpack.c.l.b16 %v125
    %v381 = vunpack.c.h.b16 %v125
    %v382 = vunpack.c.l.b16 %v126
    %v383 = vunpack.c.h.b16 %v126
    %v384 = vunpack.c.l.b16 %v127
    %v385 = vunpack.c.h.b16 %v127
    %v386 = vunpack.c.l.b16 %v128
    %v387 = vunpack.c.h.b16 %v128
    %v388 = vunpack.c.l.b16 %v129
    %v389 = vunpack.c.h.b16 %v129
    %v390 = vunpack.c.l.b16 %v130
    %v391 = vunpack.c.h.b16 %v130
    %v392 = vunpack.c.l.b16 %v131
    %v393 = vunpack.c.h.b16 %v131
    %v394 = vunpack.c.l.b16 %v132
    %v395 = vunpack.c.h.b16 %v132
    %v396 = vunpack.c.l.b16 %v133
    %v397 = vunpack.c.h.b16 %v133
    %v398 = vunpack.c.l.b16 %v134
    %v399 = vunpack.c.h.b16 %v134
    %v400 = vunpack.c.l.b16 %v135
    %v401 = vunpack.c.h.b16 %v135
    %v402 = vunpack.c.l.b16 %v136
    %v403 = vunpack.c.h.b16 %v136
    %v404 = vunpack.c.l.b16 %v137
    %v405 = vunpack.c.h.b16 %v137
    %v406 = vunpack.c.l.b16 %v138
    %v407 = vunpack.c.h.b16 %v138
    %v408 = vunpack.c.l.b16 %v139
    %v409 = vunpack.c.h.b16 %v139
    %v410 = vunpack.c.l.b16 %v140
    %v411 = vunpack.c.h.b16 %v140
    %v412 = vunpack.c.l.b16 %v141
    %v413 = vunpack.c.h.b16 %v141
    %v414 = vunpack.c.l.b16 %v142
    %v415 = vunpack.c.h.b16 %v142
    %v416 = vunpack.c.l.b16 %v143
    %v417 = vunpack.c.h.b16 %v143
    %v418 = vunpack.c.l.b16 %v144
    %v419 = vunpack.c.h.b16 %v144
    %v420 = vunpack.c.l.b16 %v145
    %v421 = vunpack.c.h.b16 %v145
    %v422 = vunpack.c.l.b16 %v146
    %v423 = vunpack.c.h.b16 %v146
    %v424 = vunpack.c.l.b16 %v147
    %v425 = vunpack.c.h.b16 %v147
    %v426 = vunpack.c.l.b16 %v148
    %v427 = vunpack.c.h.b16 %v148
    %v428 = vunpack.c.l.b16 %v149
    %v429 = vunpack.c.h.b16 %v149
    %v430 = vunpack.c.l.b16 %v150
    %v431 = vunpack.c.h.b16 %v150
    %v432 = vunpack.c.l.b16 %v151
    %v433 = vunpack.c.h.b16 %v151
    %v434 = vunpack.c.l.b16 %v152
    %v435 = vunpack.c.h.b16 %v152
    %v436 = vunpack.c.l.b16 %v153
    %v437 = vunpack.c.h.b16 %v153
    %v438 = vunpack.c.l.b16 %v154
    %v439 = vunpack.c.h.b16 %v154
    %v440 = vunpack.c.l.b16 %v155
    %v441 = vunpack.c.h.b16 %v155
    %v442 = vunpack.c.l.b16 %v156
    %v443 = vunpack.c.h.b16 %v156
    %v444 = vunpack.c.l.b16 %v157
    %v445 = vunpack.c.h.b16 %v157
    %v446 = vunpack.c.l.b16 %v158
    %v447 = vunpack.c.h.b16 %v158
    %v448 = vunpack.c.l.b16 %v159
    %v449 = vunpack.c.h.b16 %v159
    %v450 = vunpack.c.l.b16 %v160
    %v451 = vunpack.c.h.b16 %v160
    %v452 = vunpack.c.l.b16 %v161
    %v453 = vunpack.c.h.b16 %v161
    %v454 = vunpack.c.l.b16 %v162
    %v455 = vunpack.c.h.b16 %v162
    %v456 = vunpack.c.l.b16 %v163
    %v457 = vunpack.c.h.b16 %v163
    %v458 = vunpack.c.l.b16 %v164
    %v459 = vunpack.c.h.b16 %v164
    %v460 = vunpack.c.l.b16 %v165
    %v461 = vunpack.c.h.b16 %v165
    %v462 = vunpack.c.l.b16 %v166
    %v463 = vunpack.c.h.b16 %v166
    %v464 = vunpack.c.l.b16 %v167
    %v465 = vunpack.c.h.b16 %v167
    %v466 = vunpack.c.l.b16 %v168
    %v467 = vunpack.c.h.b16 %v168
    %v468 = vunpack.c.l.b16 %v169
    %v469 = vunpack.c.h.b16 %v169
    %v470 = vunpack.c.l.b16 %v170
    %v471 = vunpack.c.h.b16 %v170
    %v472 = vunpack.c.l.b16 %v171
    %v473 = vunpack.c.h.b16 %v171
    %v474 = vunpack.c.l.b16 %v172
    %v475 = vunpack.c.h.b16 %v172
    %v476 = vunpack.c.l.b16 %v173
    %v477 = vunpack.c.h.b16 %v173
    %v478 = vpack.c.b16 %v288, %v286
    %v479 = vpack.c.b16 %v289, %v287
    %v480 = vpack.c.b16 %v292, %v290
    %v481 = vpack.c.b16 %v293, %v291
    %v482 = vpack.c.b16 %v296, %v294
    %v483 = vpack.c.b16 %v297, %v295
    %v484 = vpack.c.b16 %v300, %v298
    %v485 = vpack.c.b16 %v301, %v299
    %v486 = vpack.c.b16 %v304, %v302
    %v487 = vpack.c.b16 %v305, %v303
    %v488 = vpack.c.b16 %v308, %v306
    %v489 = vpack.c.b16 %v309, %v307
    %v490 = vpack.c.b16 %v312, %v310
    %v491 = vpack.c.b16 %v313, %v311
    %v492 = vpack.c.b16 %v316, %v314
    %v493 = vpack.c.b16 %v317, %v315
    %v494 = vpack.c.b16 %v320, %v318
    %v495 = vpack.c.b16 %v321, %v319
    %v496 = vpack.c.b16 %v324, %v322
    %v497 = vpack.c.b16 %v325, %v323
    %v498 = vpack.c.b16 %v328, %v326
    %v499 = vpack.c.b16 %v329, %v327
    %v500 = vpack.c.b16 %v332, %v330
    %v501 = vpack.c.b16 %v333, %v331
    %v502 = vpack.c.b16 %v336, %v334
    %v503 = vpack.c.b16 %v337, %v335
    %v504 = vpack.c.b16 %v340, %v338
    %v505 = vpack.c.b16 %v341, %v339
    %v506 = vpack.c.b16 %v344, %v342
    %v507 = vpack.c.b16 %v345, %v343
    %v508 = vpack.c.b16 %v348, %v346
    %v509 = vpack.c.b16 %v349, %v347
    %v510 = vpack.c.b16 %v352, %v350
    %v511 = vpack.c.b16 %v353, %v351
    %v512 = vpack.c.b16 %v356, %v354
    %v513 = vpack.c.b16 %v357, %v355
    %v514 = vpack.c.b16 %v360, %v358
    %v515 = vpack.c.b16 %v361, %v359
    %v516 = vpack.c.b16 %v364, %v362
    %v517 = vpack.c.b16 %v365, %v363
    %v518 = vpack.c.b16 %v368, %v366
    %v519 = vpack.c.b16 %v369, %v367
    %v520 = vpack.c.b16 %v372, %v370
    %v521 = vpack.c.b16 %v373, %v371
    %v522 = vpack.c.b16 %v376, %v374
    %v523 = vpack.c.b16 %v377, %v375
    %v524 = vpack.c.b16 %v380, %v378
    %v525 = vpack.c.b16 %v381, %v379
    %v526 = vpack.c.b16 %v384, %v382
    %v527 = vpack.c.b16 %v385, %v383
    %v528 = vpack.c.b16 %v388, %v386
    %v529 = vpack.c.b16 %v389, %v387
    %v530 = vpack.c.b16 %v392, %v390
    %v531 = vpack.c.b16 %v393, %v391
    %v532 = vpack.c.b16 %v396, %v394
    %v533 = vpack.c.b16 %v397, %v395
    %v534 = vpack.c.b16 %v400, %v398
    %v535 = vpack.c.b16 %v401, %v399
    %v536 = vpack.c.b16 %v404, %v402
    %v537 = vpack.c.b16 %v405, %v403
    %v538 = vpack.c.b16 %v408, %v406
    %v539 = vpack.c.b16 %v409, %v407
    %v540 = vpack.c.b16 %v412, %v410
    %v541 = vpack.c.b16 %v413, %v411
    %v542 = vpack.c.b16 %v416, %v414
    %v543 = vpack.c.b16 %v417, %v415
    %v544 = vpack.c.b16 %v420, %v418
    %v545 = vpack.c.b16 %v421, %v419
    %v546 = vpack.c.b16 %v424, %v422
    %v547 = vpack.c.b16 %v425, %v423
    %v548 = vpack.c.b16 %v428, %v426
    %v549 = vpack.c.b16 %v429, %v427
    %v550 = vpack.c.b16 %v432, %v430
    %v551 = vpack.c.b16 %v433, %v431
    %v552 = vpack.c.b16 %v436, %v434
    %v553 = vpack.c.b16 %v437, %v435
    %v554 = vpack.c.b16 %v440, %v438
    %v555 = vpack.c.b16 %v441, %v439
    %v556 = vpack.c.b16 %v444, %v442
    %v557 = vpack.c.b16 %v445, %v443
    %v558 = vpack.c.b16 %v448, %v446
    %v559 = vpack.c.b16 %v449, %v447
    %v560 = vpack.c.b16 %v452, %v450
    %v561 = vpack.c.b16 %v453, %v451
    %v562 = vpack.c.b16 %v456, %v454
    %v563 = vpack.c.b16 %v457, %v455
    %v564 = vpack.c.b16 %v460, %v458
    %v565 = vpack.c.b16 %v461, %v459
    %v566 = vpack.c.b16 %v464, %v462
    %v567 = vpack.c.b16 %v465, %v463
    %v568 = vpack.c.b16 %v468, %v466
    %v569 = vpack.c.b16 %v469, %v467
    %v570 = vpack.c.b16 %v472, %v470
    %v571 = vpack.c.b16 %v473, %v471
    %v572 = vpack.c.b16 %v476, %v474
    %v573 = vpack.c.b16 %v477, %v475
    %670 = vmatprep.subr.bf16.mxu0 %v493
    %671 = vmatpush1.bf16.msra.mxu0 %v492
    %672 = vmatprep.subr.bf16.mxu0 %v491
    %673 = vmatpush1.bf16.msra.mxu0 %v490
    %674 = vmatprep.subr.bf16.mxu0 %v489
    %675 = vmatpush1.bf16.msra.mxu0 %v488
    %676 = vmatprep.subr.bf16.mxu0 %v487
    %677 = vmatpush1.bf16.msra.mxu0 %v486
    %678 = vmatprep.subr.bf16.mxu0 %v485
    %679 = vmatpush1.bf16.msra.mxu0 %v484
    %680 = vmatprep.subr.bf16.mxu0 %v483
    %681 = vmatpush1.bf16.msra.mxu0 %v482
    %682 = vmatprep.subr.bf16.mxu0 %v481
    %683 = vmatpush1.bf16.msra.mxu0 %v480
    %684 = vmatprep.subr.bf16.mxu0 %v479
    %685 = vmatpush1.bf16.msra.mxu0 %v478
    %686 = vmatprep.subr.bf16.mxu0 %v509
    %687 = vmatpush2.bf16.msra.mxu0 %v508
    %688 = vmatprep.subr.bf16.mxu0 %v507
    %689 = vmatpush2.bf16.msra.mxu0 %v506
    %690 = vmatprep.subr.bf16.mxu0 %v505
    %691 = vmatpush2.bf16.msra.mxu0 %v504
    %692 = vmatprep.subr.bf16.mxu0 %v503
    %693 = vmatpush2.bf16.msra.mxu0 %v502
    %694 = vmatprep.subr.bf16.mxu0 %v501
    %695 = vmatpush2.bf16.msra.mxu0 %v500
    %696 = vmatprep.subr.bf16.mxu0 %v499
    %697 = vmatpush2.bf16.msra.mxu0 %v498
    %698 = vmatprep.subr.bf16.mxu0 %v497
    %699 = vmatpush2.bf16.msra.mxu0 %v496
    %700 = vmatprep.subr.bf16.mxu0 %v495
    %701 = vmatpush2.bf16.msra.mxu0 %v494
    %702 = vmatprep.mubr.bf16.mxu0 %v185
    %703 = vmatmul.mubr.bf16.gmra.mxu0 %v184
    %v704 = vpop.f32.mrf.mxu0
    %v705 = vadd.f32 0.0, %v704
    %v706 = vpop.f32.mrf.mxu0
    %v707 = vadd.f32 0.0, %v706
    %v708 = vpop.f32.mrf.mxu0
    %v709 = vpop.f32.mrf.mxu0
    %710 = vdwg.mxu0
    %711 = vmatprep.subr.bf16.mxu0 %v525
    %712 = vmatpush1.bf16.msra.mxu0 %v524
    %713 = vmatprep.subr.bf16.mxu0 %v523
    %714 = vmatpush1.bf16.msra.mxu0 %v522
    %715 = vmatprep.subr.bf16.mxu0 %v521
    %716 = vmatpush1.bf16.msra.mxu0 %v520
    %717 = vmatprep.subr.bf16.mxu0 %v519
    %718 = vmatpush1.bf16.msra.mxu0 %v518
    %719 = vmatprep.subr.bf16.mxu0 %v517
    %720 = vmatpush1.bf16.msra.mxu0 %v516
    %721 = vmatprep.subr.bf16.mxu0 %v515
    %722 = vmatpush1.bf16.msra.mxu0 %v514
    %723 = vmatprep.subr.bf16.mxu0 %v513
    %724 = vmatpush1.bf16.msra.mxu0 %v512
    %725 = vmatprep.subr.bf16.mxu0 %v511
    %726 = vmatpush1.bf16.msra.mxu0 %v510
    %727 = vmatprep.subr.bf16.mxu0 %v541
    %728 = vmatpush2.bf16.msra.mxu0 %v540
    %729 = vmatprep.subr.bf16.mxu0 %v539
    %730 = vmatpush2.bf16.msra.mxu0 %v538
    %731 = vmatprep.subr.bf16.mxu0 %v537
    %732 = vmatpush2.bf16.msra.mxu0 %v536
    %733 = vmatprep.subr.bf16.mxu0 %v535
    %734 = vmatpush2.bf16.msra.mxu0 %v534
    %735 = vmatprep.subr.bf16.mxu0 %v533
    %736 = vmatpush2.bf16.msra.mxu0 %v532
    %737 = vmatprep.subr.bf16.mxu0 %v531
    %738 = vmatpush2.bf16.msra.mxu0 %v530
    %739 = vmatprep.subr.bf16.mxu0 %v529
    %740 = vmatpush2.bf16.msra.mxu0 %v528
    %741 = vmatprep.subr.bf16.mxu0 %v527
    %742 = vmatpush2.bf16.msra.mxu0 %v526
    %743 = vmatprep.mubr.bf16.mxu0 %v187
    %744 = vmatmul.mubr.bf16.gmra.mxu0 %v186
    %v745 = vpop.f32.mrf.mxu0
    %v746 = vadd.f32 %v705, %v745
    %v747 = vpop.f32.mrf.mxu0
    %v748 = vadd.f32 %v707, %v747
    %v749 = vpop.f32.mrf.mxu0
    %v750 = vpop.f32.mrf.mxu0
    %751 = vdwg.mxu0
    %752 = vmatprep.subr.bf16.mxu0 %v557
    %753 = vmatpush1.bf16.msra.mxu0 %v556
    %754 = vmatprep.subr.bf16.mxu0 %v555
    %755 = vmatpush1.bf16.msra.mxu0 %v554
    %756 = vmatprep.subr.bf16.mxu0 %v553
    %757 = vmatpush1.bf16.msra.mxu0 %v552
    %758 = vmatprep.subr.bf16.mxu0 %v551
    %759 = vmatpush1.bf16.msra.mxu0 %v550
    %760 = vmatprep.subr.bf16.mxu0 %v549
    %761 = vmatpush1.bf16.msra.mxu0 %v548
    %762 = vmatprep.subr.bf16.mxu0 %v547
    %763 = vmatpush1.bf16.msra.mxu0 %v546
    %764 = vmatprep.subr.bf16.mxu0 %v545
    %765 = vmatpush1.bf16.msra.mxu0 %v544
    %766 = vmatprep.subr.bf16.mxu0 %v543
    %767 = vmatpush1.bf16.msra.mxu0 %v542
    %768 = vmatprep.subr.bf16.mxu0 %v573
    %769 = vmatpush2.bf16.msra.mxu0 %v572
    %770 = vmatprep.subr.bf16.mxu0 %v571
    %771 = vmatpush2.bf16.msra.mxu0 %v570
    %772 = vmatprep.subr.bf16.mxu0 %v569
    %773 = vmatpush2.bf16.msra.mxu0 %v568
    %774 = vmatprep.subr.bf16.mxu0 %v567
    %775 = vmatpush2.bf16.msra.mxu0 %v566
    %776 = vmatprep.subr.bf16.mxu0 %v565
    %777 = vmatpush2.bf16.msra.mxu0 %v564
    %778 = vmatprep.subr.bf16.mxu0 %v563
    %779 = vmatpush2.bf16.msra.mxu0 %v562
    %780 = vmatprep.subr.bf16.mxu0 %v561
    %781 = vmatpush2.bf16.msra.mxu0 %v560
    %782 = vmatprep.subr.bf16.mxu0 %v559
    %783 = vmatpush2.bf16.msra.mxu0 %v558
    %784 = vmatprep.mubr.bf16.mxu0 %v189
    %785 = vmatmul.mubr.bf16.gmra.mxu0 %v188
    %v786 = vpop.f32.mrf.mxu0
    %v787 = vadd.f32 %v746, %v786
    %v788 = vpop.f32.mrf.mxu0
    %v789 = vadd.f32 %v748, %v788
    %v790 = vpop.f32.mrf.mxu0
    %v791 = vpop.f32.mrf.mxu0
    %792 = vdwg.mxu0
    %793 = vst [vmem:[#allocation4] sm:$0xff] %v787
    %vm794 = vcmask 523264
    %795 = vst.msk [vmem:[#allocation4 + $0x8] sm:$0xff] %vm794, %v789
    %v796 = vld [vmem:[%s6] sm:$0x77]
    %v797 = vld [vmem:[#allocation4] sm:$0xff]
    %v798 = vld [vmem:[#allocation4 + $0x8] sm:$0xff]
    %v800 = vlaneseq
    %v801 = vshrl.u32 %v800, 7
    %v802 = vsub.s32 0, %v801
    %v803 = vrot.slane %v796, %v802
    %v804 = vlaneseq
    %v805 = vshrl.u32 %v804, 7
    %v806 = vsub.s32 4, %v805
    %v807 = vrot.slane %v796, %v806
    %v810 = vlaneseq
    %v811 = vshrl.u32 %v810, 7
    %v812 = vsub.s32 0, %v811
    %v813 = vrot.slane %v803, %v812
    %v814 = vlaneseq
    %v815 = vshrl.u32 %v814, 7
    %v816 = vsub.s32 0, %v815
    %v817 = vrot.slane %v807, %v816
    %v818 = vadd.f32 %v797, %v813
    %v819 = vadd.f32 %v798, %v817
    %v820 = vmul.f32 %v818, 0.5
    %v821 = vmul.f32 %v819, 0.5
    %v822 = vtanh.pop %v820
    %v823 = vtanh.pop %v821
    %v824 = vadd.f32 %v822, 1.0
    %v825 = vadd.f32 %v823, 1.0
    %v826 = vmul.f32 %v820, %v824
    %v827 = vmul.f32 %v821, %v825
    %v828 = vrot.slane %v826, 4
    %v829 = vadd.f32 %v826, %v828
    %v830 = vrot.slane %v829, 2
    %v831 = vadd.f32 %v829, %v830
    %v832 = vrot.slane %v831, 1
    %v833 = vadd.f32 %v831, %v832
    %v834 = vsel %vm794, %v827, 0.0
    %v835 = vrot.slane %v834, 4
    %v836 = vadd.f32 %v834, %v835
    %v837 = vrot.slane %v836, 2
    %v838 = vadd.f32 %v836, %v837
    %v839 = vrot.slane %v838, 1
    %v840 = vadd.f32 %v838, %v839
    %v841 = vrcp.pop 8.0
    %v842 = vmul.f32 %v833, %v841
    %v843 = vmul.f32 %v840, %v841
    %v844 = vsub.f32 %v826, %v842
    %v845 = vsub.f32 %v827, %v843
    %v846 = vmul.f32 %v844, %v844
    %v847 = vmul.f32 %v845, %v845
    %v848 = vrot.slane %v846, 4
    %v849 = vadd.f32 %v846, %v848
    %v850 = vrot.slane %v849, 2
    %v851 = vadd.f32 %v849, %v850
    %v852 = vrot.slane %v851, 1
    %v853 = vadd.f32 %v851, %v852
    %v854 = vsel %vm794, %v847, 0.0
    %v855 = vrot.slane %v854, 4
    %v856 = vadd.f32 %v854, %v855
    %v857 = vrot.slane %v856, 2
    %v858 = vadd.f32 %v856, %v857
    %v859 = vrot.slane %v858, 1
    %v860 = vadd.f32 %v858, %v859
    %v861 = vmul.f32 %v853, %v841
    %v862 = vmul.f32 %v860, %v841
    %v863 = vadd.f32 %v861, 1e-05
    %v864 = vadd.f32 %v862, 1e-05
    %v865 = vrsqrt.pop %v863
    %v866 = vrsqrt.pop %v864
    %v869 = vcombine.low %v865, %v866
    %v870 = vrot.slane %v869, 7
    %v872 = vmul.f32 %v796, %v870
    %v874 = vlaneseq
    %v875 = vshrl.u32 %v874, 7
    %v876 = vsub.s32 1, %v875
    %v877 = vrot.slane %v872, %v876
    %v878 = vlaneseq
    %v879 = vshrl.u32 %v878, 7
    %v880 = vsub.s32 5, %v879
    %v881 = vrot.slane %v872, %v880
    %v884 = vlaneseq
    %v885 = vshrl.u32 %v884, 7
    %v886 = vsub.s32 1, %v885
    %v887 = vrot.slane %v877, %v886
    %v888 = vlaneseq
    %v889 = vshrl.u32 %v888, 7
    %v890 = vsub.s32 1, %v889
    %v891 = vrot.slane %v881, %v890
    %v892 = vmul.f32 %v844, %v887
    %v893 = vmul.f32 %v845, %v891
    %v894 = vlaneseq
    %v895 = vshrl.u32 %v894, 7
    %v896 = vsub.s32 2, %v895
    %v897 = vrot.slane %v796, %v896
    %v898 = vlaneseq
    %v899 = vshrl.u32 %v898, 7
    %v900 = vsub.s32 6, %v899
    %v901 = vrot.slane %v796, %v900
    %v904 = vlaneseq
    %v905 = vshrl.u32 %v904, 7
    %v906 = vsub.s32 2, %v905
    %v907 = vrot.slane %v897, %v906
    %v908 = vlaneseq
    %v909 = vshrl.u32 %v908, 7
    %v910 = vsub.s32 2, %v909
    %v911 = vrot.slane %v901, %v910
    %v912 = vadd.f32 %v892, %v907
    %v913 = vadd.f32 %v893, %v911
    %v914 = vld [vmem:[%s6 + $0x8] sm:$0x7]
    %v915 = vld [vmem:[%s4] sm:$0xff]
    %v916 = vld [vmem:[%s4 + $0x8] sm:$0xff]
    %v917 = vld [vmem:[%s4 + $0x10] sm:$0xff]
    %v918 = vld [vmem:[%s4 + $0x18] sm:$0xff]
    %v919 = vld [vmem:[%s4 + $0x20] sm:$0xff]
    %v920 = vld [vmem:[%s4 + $0x28] sm:$0xff]
    %v921 = vld [vmem:[%s4 + $0x30] sm:$0xff]
    %v922 = vld [vmem:[%s4 + $0x38] sm:$0xff]
    %v923 = vld [vmem:[%s4 + $0x40] sm:$0xff]
    %v924 = vld [vmem:[%s4 + $0x48] sm:$0xff]
    %v925 = vld [vmem:[%s4 + $0x50] sm:$0xff]
    %v926 = vld [vmem:[%s4 + $0x58] sm:$0xff]
    %v927 = vld [vmem:[%s4 + $0x60] sm:$0xff]
    %v928 = vld [vmem:[%s4 + $0x68] sm:$0xff]
    %v929 = vld [vmem:[%s4 + $0x70] sm:$0xff]
    %v930 = vld [vmem:[%s4 + $0x78] sm:$0xff]
    %v931 = vld [vmem:[%s4 + $0x80] sm:$0xff]
    %v932 = vld [vmem:[%s4 + $0x88] sm:$0xff]
    %v933 = vld [vmem:[%s4 + $0x90] sm:$0xff]
    %v934 = vld [vmem:[%s4 + $0x98] sm:$0xff]
    %v935 = vld [vmem:[%s4 + $0xa0] sm:$0xff]
    %v936 = vld [vmem:[%s4 + $0xa8] sm:$0xff]
    %v937 = vld [vmem:[%s4 + $0xb0] sm:$0xff]
    %v938 = vld [vmem:[%s4 + $0xb8] sm:$0xff]
    %v939 = vlaneseq
    %v940 = vshrl.u32 %v939, 7
    %v941 = vsub.s32 0, %v940
    %v942 = vrot.slane %v914, %v941
    %v944 = vsel %vm794, %v913, 0
    %946 = vmatprep.subr.mxu0 0.0
    %947 = vmatpush1.msra.mxu0 %v930
    %948 = vmatprep.subr.mxu0 0.0
    %949 = vmatpush1.msra.mxu0 %v929
    %950 = vmatprep.subr.mxu0 0.0
    %951 = vmatpush1.msra.mxu0 %v928
    %952 = vmatprep.subr.mxu0 0.0
    %953 = vmatpush1.msra.mxu0 %v927
    %954 = vmatprep.subr.mxu0 0.0
    %955 = vmatpush1.msra.mxu0 %v926
    %956 = vmatprep.subr.mxu0 0.0
    %957 = vmatpush1.msra.mxu0 %v925
    %958 = vmatprep.subr.mxu0 0.0
    %959 = vmatpush1.msra.mxu0 %v924
    %960 = vmatprep.subr.mxu0 0.0
    %961 = vmatpush1.msra.mxu0 %v923
    %962 = vmatprep.subr.mxu0 0.0
    %963 = vmatpush1.msra.mxu0 %v922
    %964 = vmatprep.subr.mxu0 0.0
    %965 = vmatpush1.msra.mxu0 %v921
    %966 = vmatprep.subr.mxu0 0.0
    %967 = vmatpush1.msra.mxu0 %v920
    %968 = vmatprep.subr.mxu0 0.0
    %969 = vmatpush1.msra.mxu0 %v919
    %970 = vmatprep.subr.mxu0 0.0
    %971 = vmatpush1.msra.mxu0 %v918
    %972 = vmatprep.subr.mxu0 0.0
    %973 = vmatpush1.msra.mxu0 %v917
    %974 = vmatprep.subr.mxu0 0.0
    %975 = vmatpush1.msra.mxu0 %v916
    %976 = vmatprep.subr.mxu0 0.0
    %977 = vmatpush1.msra.mxu0 %v915
    %978 = vmatprep.subr.mxu0 0.0
    %979 = vmatpush2.msra.mxu0 0.0
    %980 = vmatprep.subr.mxu0 0.0
    %981 = vmatpush2.msra.mxu0 0.0
    %982 = vmatprep.subr.mxu0 0.0
    %983 = vmatpush2.msra.mxu0 0.0
    %984 = vmatprep.subr.mxu0 0.0
    %985 = vmatpush2.msra.mxu0 0.0
    %986 = vmatprep.subr.mxu0 0.0
    %987 = vmatpush2.msra.mxu0 0.0
    %988 = vmatprep.subr.mxu0 0.0
    %989 = vmatpush2.msra.mxu0 0.0
    %990 = vmatprep.subr.mxu0 0.0
    %991 = vmatpush2.msra.mxu0 0.0
    %992 = vmatprep.subr.mxu0 0.0
    %993 = vmatpush2.msra.mxu0 0.0
    %994 = vmatprep.subr.mxu0 0.0
    %995 = vmatpush2.msra.mxu0 %v938
    %996 = vmatprep.subr.mxu0 0.0
    %997 = vmatpush2.msra.mxu0 %v937
    %998 = vmatprep.subr.mxu0 0.0
    %999 = vmatpush2.msra.mxu0 %v936
    %1000 = vmatprep.subr.mxu0 0.0
    %1001 = vmatpush2.msra.mxu0 %v935
    %1002 = vmatprep.subr.mxu0 0.0
    %1003 = vmatpush2.msra.mxu0 %v934
    %1004 = vmatprep.subr.mxu0 0.0
    %1005 = vmatpush2.msra.mxu0 %v933
    %1006 = vmatprep.subr.mxu0 0.0
    %1007 = vmatpush2.msra.mxu0 %v932
    %1008 = vmatprep.subr.mxu0 0.0
    %1009 = vmatpush2.msra.mxu0 %v931
    %1010 = vmatprep.mubr.f32.mxu0 %v944
    %1011 = vmatmul.mubr.f32.gmra.mxu0 %v912
    %v1012 = vpop.f32.mrf.mxu0
    %v1013 = vadd.f32 %v942, %v1012
    %v1014 = vpop.f32.mrf.mxu0
    %1015 = vdwg.mxu0
    %v1016 = vmul.f32 %v1013, 0.5
    %v1017 = vtanh.pop %v1016
    %v1018 = vadd.f32 %v1017, 1.0
    %v1019 = vmul.f32 %v1016, %v1018
    %vm1020 = vcmask 392192
    %v1021 = vsel %vm1020, %v1019, 0.0
    %v1022 = vrot.slane %v1021, 4
    %v1023 = vadd.f32 %v1021, %v1022
    %v1024 = vrot.slane %v1023, 2
    %v1025 = vadd.f32 %v1023, %v1024
    %v1026 = vrot.slane %v1025, 1
    %v1027 = vadd.f32 %v1025, %v1026
    %v1028 = vmul.f32 %v1027, %v841
    %v1029 = vsub.f32 %v1019, %v1028
    %v1030 = vmul.f32 %v1029, %v1029
    %v1031 = vsel %vm1020, %v1030, 0.0
    %v1032 = vrot.slane %v1031, 4
    %v1033 = vadd.f32 %v1031, %v1032
    %v1034 = vrot.slane %v1033, 2
    %v1035 = vadd.f32 %v1033, %v1034
    %v1036 = vrot.slane %v1035, 1
    %v1037 = vadd.f32 %v1035, %v1036
    %v1038 = vmul.f32 %v1037, %v841
    %v1039 = vadd.f32 %v1038, 1e-05
    %v1040 = vrsqrt.pop %v1039
    %v1041 = vmul.f32 %v914, %v1040
    %v1042 = vlaneseq
    %v1043 = vshrl.u32 %v1042, 7
    %v1044 = vsub.s32 1, %v1043
    %v1045 = vrot.slane %v1041, %v1044
    %v1046 = vmul.f32 %v1029, %v1045
    %v1047 = vlaneseq
    %v1048 = vshrl.u32 %v1047, 7
    %v1049 = vsub.s32 2, %v1048
    %v1050 = vrot.slane %v914, %v1049
    %v1051 = vadd.f32 %v1046, %v1050
    %v1052 = vld [vmem:[%s6 + $0xc] sm:$0x7]
    %v1053 = vld [vmem:[%s5] sm:$0xff]
    %v1054 = vld [vmem:[%s5 + $0x50] sm:$0xff]
    %v1055 = vld [vmem:[%s5 + $0xa0] sm:$0xff]
    %v1056 = vld [vmem:[%s5 + $0xf0] sm:$0xff]
    %v1057 = vld [vmem:[%s5 + $0x140] sm:$0xff]
    %v1058 = vld [vmem:[%s5 + $0x190] sm:$0xff]
    %v1059 = vlaneseq
    %v1060 = vshrl.u32 %v1059, 7
    %v1061 = vsub.s32 0, %v1060
    %v1062 = vrot.slane %v1052, %v1061
    %v1064 = vsel %vm1020, %v1051, 0
    %1066 = vmatprep.subr.mxu0 0.0
    %1067 = vmatpush1.msra.mxu0 0.0
    %1068 = vmatprep.subr.mxu0 0.0
    %1069 = vmatpush1.msra.mxu0 0.0
    %1070 = vmatprep.subr.mxu0 0.0
    %1071 = vmatpush1.msra.mxu0 0.0
    %1072 = vmatprep.subr.mxu0 0.0
    %1073 = vmatpush1.msra.mxu0 0.0
    %1074 = vmatprep.subr.mxu0 0.0
    %1075 = vmatpush1.msra.mxu0 0.0
    %1076 = vmatprep.subr.mxu0 0.0
    %1077 = vmatpush1.msra.mxu0 0.0
    %1078 = vmatprep.subr.mxu0 0.0
    %1079 = vmatpush1.msra.mxu0 0.0
    %1080 = vmatprep.subr.mxu0 0.0
    %1081 = vmatpush1.msra.mxu0 0.0
    %1082 = vmatprep.subr.mxu0 0.0
    %1083 = vmatpush1.msra.mxu0 0.0
    %1084 = vmatprep.subr.mxu0 0.0
    %1085 = vmatpush1.msra.mxu0 0.0
    %1086 = vmatprep.subr.mxu0 0.0
    %1087 = vmatpush1.msra.mxu0 %v1058
    %1088 = vmatprep.subr.mxu0 0.0
    %1089 = vmatpush1.msra.mxu0 %v1057
    %1090 = vmatprep.subr.mxu0 0.0
    %1091 = vmatpush1.msra.mxu0 %v1056
    %1092 = vmatprep.subr.mxu0 0.0
    %1093 = vmatpush1.msra.mxu0 %v1055
    %1094 = vmatprep.subr.mxu0 0.0
    %1095 = vmatpush1.msra.mxu0 %v1054
    %1096 = vmatprep.subr.mxu0 0.0
    %1097 = vmatpush1.msra.mxu0 %v1053
    %1098 = vmatprep.subr.mxu0 0.0
    %1099 = vmatpush2.msra.mxu0 0.0
    %1100 = vmatprep.subr.mxu0 0.0
    %1101 = vmatpush2.msra.mxu0 0.0
    %1102 = vmatprep.subr.mxu0 0.0
    %1103 = vmatpush2.msra.mxu0 0.0
    %1104 = vmatprep.subr.mxu0 0.0
    %1105 = vmatpush2.msra.mxu0 0.0
    %1106 = vmatprep.subr.mxu0 0.0
    %1107 = vmatpush2.msra.mxu0 0.0
    %1108 = vmatprep.subr.mxu0 0.0
    %1109 = vmatpush2.msra.mxu0 0.0
    %1110 = vmatprep.subr.mxu0 0.0
    %1111 = vmatpush2.msra.mxu0 0.0
    %1112 = vmatprep.subr.mxu0 0.0
    %1113 = vmatpush2.msra.mxu0 0.0
    %1114 = vmatprep.subr.mxu0 0.0
    %1115 = vmatpush2.msra.mxu0 0.0
    %1116 = vmatprep.subr.mxu0 0.0
    %1117 = vmatpush2.msra.mxu0 0.0
    %1118 = vmatprep.subr.mxu0 0.0
    %1119 = vmatpush2.msra.mxu0 0.0
    %1120 = vmatprep.subr.mxu0 0.0
    %1121 = vmatpush2.msra.mxu0 0.0
    %1122 = vmatprep.subr.mxu0 0.0
    %1123 = vmatpush2.msra.mxu0 0.0
    %1124 = vmatprep.subr.mxu0 0.0
    %1125 = vmatpush2.msra.mxu0 0.0
    %1126 = vmatprep.subr.mxu0 0.0
    %1127 = vmatpush2.msra.mxu0 0.0
    %1128 = vmatprep.subr.mxu0 0.0
    %1129 = vmatpush2.msra.mxu0 0.0
    %1130 = vmatprep.mubr.f32.mxu0 0.0
    %1131 = vmatmul.mubr.f32.gmra.mxu0 %v1064
    %v1132 = vpop.f32.mrf.mxu0
    %v1133 = vadd.f32 %v1062, %v1132
    %v1134 = vpop.f32.mrf.mxu0
    %1135 = vdwg.mxu0
    %v1136 = vmul.f32 %v1133, 0.5
    %v1137 = vtanh.pop %v1136
    %v1138 = vadd.f32 %v1137, 1.0
    %v1139 = vmul.f32 %v1136, %v1138
    %vm1140 = vcmask 97280
    %v1141 = vsel %vm1140, %v1139, 0.0
    %v1142 = vrot.slane %v1141, 4
    %v1143 = vadd.f32 %v1141, %v1142
    %v1144 = vrot.slane %v1143, 2
    %v1145 = vadd.f32 %v1143, %v1144
    %v1146 = vrot.slane %v1145, 1
    %v1147 = vadd.f32 %v1145, %v1146
    %v1148 = vmul.f32 %v1147, %v841
    %v1149 = vsub.f32 %v1139, %v1148
    %v1150 = vmul.f32 %v1149, %v1149
    %v1151 = vsel %vm1140, %v1150, 0.0
    %v1152 = vrot.slane %v1151, 4
    %v1153 = vadd.f32 %v1151, %v1152
    %v1154 = vrot.slane %v1153, 2
    %v1155 = vadd.f32 %v1153, %v1154
    %v1156 = vrot.slane %v1155, 1
    %v1157 = vadd.f32 %v1155, %v1156
    %v1158 = vmul.f32 %v1157, %v841
    %v1159 = vadd.f32 %v1158, 1e-05
    %v1160 = vrsqrt.pop %v1159
    %v1161 = vmul.f32 %v1052, %v1160
    %v1162 = vlaneseq
    %v1163 = vshrl.u32 %v1162, 7
    %v1164 = vsub.s32 1, %v1163
    %v1165 = vrot.slane %v1161, %v1164
    %v1166 = vmul.f32 %v1149, %v1165
    %v1167 = vlaneseq
    %v1168 = vshrl.u32 %v1167, 7
    %v1169 = vsub.s32 2, %v1168
    %v1170 = vrot.slane %v1052, %v1169
    %v1171 = vadd.f32 %v1166, %v1170
    %v1172 = vld [vmem:[%s6 + $0x10] sm:$0x7]
    %v1173 = vld [vmem:[%s5 + $0x8] sm:$0xff]
    %v1174 = vld [vmem:[%s5 + $0x58] sm:$0xf]
    %v1175 = vlaneseq
    %v1176 = vshrl.u32 %v1175, 7
    %v1177 = vsub.s32 0, %v1176
    %v1178 = vrot.slane %v1172, %v1177
    %v1180 = vsel %vm1140, %v1171, 0
    %vm1182 = vcmask 1043456
    %v1184 = vsel %vm1182, %v1174, 0
    %1186 = vmatprep.subr.mxu0 0.0
    %1187 = vmatpush1.msra.mxu0 0.0
    %1188 = vmatprep.subr.mxu0 0.0
    %1189 = vmatpush1.msra.mxu0 0.0
    %1190 = vmatprep.subr.mxu0 0.0
    %1191 = vmatpush1.msra.mxu0 0.0
    %1192 = vmatprep.subr.mxu0 0.0
    %1193 = vmatpush1.msra.mxu0 0.0
    %1194 = vmatprep.subr.mxu0 0.0
    %1195 = vmatpush1.msra.mxu0 0.0
    %1196 = vmatprep.subr.mxu0 0.0
    %1197 = vmatpush1.msra.mxu0 0.0
    %1198 = vmatprep.subr.mxu0 0.0
    %1199 = vmatpush1.msra.mxu0 0.0
    %1200 = vmatprep.subr.mxu0 0.0
    %1201 = vmatpush1.msra.mxu0 0.0
    %1202 = vmatprep.subr.mxu0 0.0
    %1203 = vmatpush1.msra.mxu0 0.0
    %1204 = vmatprep.subr.mxu0 0.0
    %1205 = vmatpush1.msra.mxu0 0.0
    %1206 = vmatprep.subr.mxu0 0.0
    %1207 = vmatpush1.msra.mxu0 0.0
    %1208 = vmatprep.subr.mxu0 0.0
    %1209 = vmatpush1.msra.mxu0 0.0
    %1210 = vmatprep.subr.mxu0 0.0
    %1211 = vmatpush1.msra.mxu0 0.0
    %1212 = vmatprep.subr.mxu0 0.0
    %1213 = vmatpush1.msra.mxu0 0.0
    %1214 = vmatprep.subr.mxu0 0.0
    %1215 = vmatpush1.msra.mxu0 %v1184
    %1216 = vmatprep.subr.mxu0 0.0
    %1217 = vmatpush1.msra.mxu0 %v1173
    %1218 = vmatprep.subr.mxu0 0.0
    %1219 = vmatpush2.msra.mxu0 0.0
    %1220 = vmatprep.subr.mxu0 0.0
    %1221 = vmatpush2.msra.mxu0 0.0
    %1222 = vmatprep.subr.mxu0 0.0
    %1223 = vmatpush2.msra.mxu0 0.0
    %1224 = vmatprep.subr.mxu0 0.0
    %1225 = vmatpush2.msra.mxu0 0.0
    %1226 = vmatprep.subr.mxu0 0.0
    %1227 = vmatpush2.msra.mxu0 0.0
    %1228 = vmatprep.subr.mxu0 0.0
    %1229 = vmatpush2.msra.mxu0 0.0
    %1230 = vmatprep.subr.mxu0 0.0
    %1231 = vmatpush2.msra.mxu0 0.0
    %1232 = vmatprep.subr.mxu0 0.0
    %1233 = vmatpush2.msra.mxu0 0.0
    %1234 = vmatprep.subr.mxu0 0.0
    %1235 = vmatpush2.msra.mxu0 0.0
    %1236 = vmatprep.subr.mxu0 0.0
    %1237 = vmatpush2.msra.mxu0 0.0
    %1238 = vmatprep.subr.mxu0 0.0
    %1239 = vmatpush2.msra.mxu0 0.0
    %1240 = vmatprep.subr.mxu0 0.0
    %1241 = vmatpush2.msra.mxu0 0.0
    %1242 = vmatprep.subr.mxu0 0.0
    %1243 = vmatpush2.msra.mxu0 0.0
    %1244 = vmatprep.subr.mxu0 0.0
    %1245 = vmatpush2.msra.mxu0 0.0
    %1246 = vmatprep.subr.mxu0 0.0
    %1247 = vmatpush2.msra.mxu0 0.0
    %1248 = vmatprep.subr.mxu0 0.0
    %1249 = vmatpush2.msra.mxu0 0.0
    %1250 = vmatprep.mubr.f32.mxu0 0.0
    %1251 = vmatmul.mubr.f32.gmra.mxu0 %v1180
    %v1252 = vpop.f32.mrf.mxu0
    %v1253 = vadd.f32 %v1178, %v1252
    %v1254 = vpop.f32.mrf.mxu0
    %1255 = vdwg.mxu0
    %v1256 = vmul.f32 %v1253, 0.5
    %v1257 = vtanh.pop %v1256
    %v1258 = vadd.f32 %v1257, 1.0
    %v1259 = vmul.f32 %v1256, %v1258
    %vm1260 = vcmask 23552
    %v1261 = vsel %vm1260, %v1259, 0.0
    %v1262 = vrot.slane %v1261, 4
    %v1263 = vadd.f32 %v1261, %v1262
    %v1264 = vrot.slane %v1263, 2
    %v1265 = vadd.f32 %v1263, %v1264
    %v1266 = vrot.slane %v1265, 1
    %v1267 = vadd.f32 %v1265, %v1266
    %v1268 = vmul.f32 %v1267, %v841
    %v1269 = vsub.f32 %v1259, %v1268
    %v1270 = vmul.f32 %v1269, %v1269
    %v1271 = vsel %vm1260, %v1270, 0.0
    %v1272 = vrot.slane %v1271, 4
    %v1273 = vadd.f32 %v1271, %v1272
    %v1274 = vrot.slane %v1273, 2
    %v1275 = vadd.f32 %v1273, %v1274
    %v1276 = vrot.slane %v1275, 1
    %v1277 = vadd.f32 %v1275, %v1276
    %v1278 = vmul.f32 %v1277, %v841
    %v1279 = vadd.f32 %v1278, 1e-05
    %v1280 = vrsqrt.pop %v1279
    %v1281 = vmul.f32 %v1172, %v1280
    %v1282 = vlaneseq
    %v1283 = vshrl.u32 %v1282, 7
    %v1284 = vsub.s32 1, %v1283
    %v1285 = vrot.slane %v1281, %v1284
    %v1286 = vmul.f32 %v1269, %v1285
    %v1287 = vlaneseq
    %v1288 = vshrl.u32 %v1287, 7
    %v1289 = vsub.s32 2, %v1288
    %v1290 = vrot.slane %v1172, %v1289
    %v1291 = vadd.f32 %v1286, %v1290
    %v1292 = vld [vmem:[%s5 + $0x10] sm:$0x7]
    %v1293 = vld [vmem:[%s6 + $0x14] sm:$0x1]
    %v1294 = vlaneseq
    %v1295 = vshrl.u32 %v1294, 7
    %v1296 = vsub.s32 0, %v1295
    %v1297 = vrot.slane %v1293, %v1296
    %v1299 = vsel %vm1260, %v1291, 0
    %vm1301 = vcmask 1042432
    %v1303 = vsel %vm1301, %v1292, 0
    %1305 = vmatprep.subr.mxu0 0.0
    %1306 = vmatpush1.msra.mxu0 0.0
    %1307 = vmatprep.subr.mxu0 0.0
    %1308 = vmatpush1.msra.mxu0 0.0
    %1309 = vmatprep.subr.mxu0 0.0
    %1310 = vmatpush1.msra.mxu0 0.0
    %1311 = vmatprep.subr.mxu0 0.0
    %1312 = vmatpush1.msra.mxu0 0.0
    %1313 = vmatprep.subr.mxu0 0.0
    %1314 = vmatpush1.msra.mxu0 0.0
    %1315 = vmatprep.subr.mxu0 0.0
    %1316 = vmatpush1.msra.mxu0 0.0
    %1317 = vmatprep.subr.mxu0 0.0
    %1318 = vmatpush1.msra.mxu0 0.0
    %1319 = vmatprep.subr.mxu0 0.0
    %1320 = vmatpush1.msra.mxu0 0.0
    %1321 = vmatprep.subr.mxu0 0.0
    %1322 = vmatpush1.msra.mxu0 0.0
    %1323 = vmatprep.subr.mxu0 0.0
    %1324 = vmatpush1.msra.mxu0 0.0
    %1325 = vmatprep.subr.mxu0 0.0
    %1326 = vmatpush1.msra.mxu0 0.0
    %1327 = vmatprep.subr.mxu0 0.0
    %1328 = vmatpush1.msra.mxu0 0.0
    %1329 = vmatprep.subr.mxu0 0.0
    %1330 = vmatpush1.msra.mxu0 0.0
    %1331 = vmatprep.subr.mxu0 0.0
    %1332 = vmatpush1.msra.mxu0 0.0
    %1333 = vmatprep.subr.mxu0 0.0
    %1334 = vmatpush1.msra.mxu0 0.0
    %1335 = vmatprep.subr.mxu0 0.0
    %1336 = vmatpush1.msra.mxu0 %v1303
    %1337 = vmatprep.subr.mxu0 0.0
    %1338 = vmatpush2.msra.mxu0 0.0
    %1339 = vmatprep.subr.mxu0 0.0
    %1340 = vmatpush2.msra.mxu0 0.0
    %1341 = vmatprep.subr.mxu0 0.0
    %1342 = vmatpush2.msra.mxu0 0.0
    %1343 = vmatprep.subr.mxu0 0.0
    %1344 = vmatpush2.msra.mxu0 0.0
    %1345 = vmatprep.subr.mxu0 0.0
    %1346 = vmatpush2.msra.mxu0 0.0
    %1347 = vmatprep.subr.mxu0 0.0
    %1348 = vmatpush2.msra.mxu0 0.0
    %1349 = vmatprep.subr.mxu0 0.0
    %1350 = vmatpush2.msra.mxu0 0.0
    %1351 = vmatprep.subr.mxu0 0.0
    %1352 = vmatpush2.msra.mxu0 0.0
    %1353 = vmatprep.subr.mxu0 0.0
    %1354 = vmatpush2.msra.mxu0 0.0
    %1355 = vmatprep.subr.mxu0 0.0
    %1356 = vmatpush2.msra.mxu0 0.0
    %1357 = vmatprep.subr.mxu0 0.0
    %1358 = vmatpush2.msra.mxu0 0.0
    %1359 = vmatprep.subr.mxu0 0.0
    %1360 = vmatpush2.msra.mxu0 0.0
    %1361 = vmatprep.subr.mxu0 0.0
    %1362 = vmatpush2.msra.mxu0 0.0
    %1363 = vmatprep.subr.mxu0 0.0
    %1364 = vmatpush2.msra.mxu0 0.0
    %1365 = vmatprep.subr.mxu0 0.0
    %1366 = vmatpush2.msra.mxu0 0.0
    %1367 = vmatprep.subr.mxu0 0.0
    %1368 = vmatpush2.msra.mxu0 0.0
    %1369 = vmatprep.mubr.f32.mxu0 0.0
    %1370 = vmatmul.mubr.f32.gmra.mxu0 %v1299
    %v1371 = vpop.f32.mrf.mxu0
    %v1372 = vadd.f32 %v1297, %v1371
    %v1373 = vpop.f32.mrf.mxu0
    %1374 = vdwg.mxu0
    %v1375 = vmul.f32 %v1372, 0.5
    %v1376 = vtanh.pop %v1375
    %v1377 = vadd.f32 %v1376, 1.0
    %v1378 = vmul.f32 %v1375, %v1377
    %v1379 = vld [vmem:[%s6 + $0x18] sm:$0x7]
    %v1380 = vld [vmem:[%s2] sm:$0xff]
    %v1381 = vld [vmem:[%s5 + $0x18] sm:$0xff]
    %v1382 = vld [vmem:[%s5 + $0x68] sm:$0xff]
    %v1383 = vld [vmem:[%s5 + $0xb8] sm:$0xff]
    %v1384 = vld [vmem:[%s5 + $0x108] sm:$0xff]
    %v1385 = vld [vmem:[%s5 + $0x158] sm:$0xff]
    %v1386 = vld [vmem:[%s5 + $0x1a8] sm:$0xf]
    %v1387 = vlaneseq
    %v1388 = vshrl.u32 %v1387, 7
    %v1389 = vsub.s32 0, %v1388
    %v1390 = vrot.slane %v1379, %v1389
    %vm1391 = vcmask 359424
    %v1393 = vsel %vm1391, %v1380, 0
    %v1396 = vsel %vm1182, %v1386, 0
    %1398 = vmatprep.subr.mxu0 0.0
    %1399 = vmatpush1.msra.mxu0 0.0
    %1400 = vmatprep.subr.mxu0 0.0
    %1401 = vmatpush1.msra.mxu0 0.0
    %1402 = vmatprep.subr.mxu0 0.0
    %1403 = vmatpush1.msra.mxu0 0.0
    %1404 = vmatprep.subr.mxu0 0.0
    %1405 = vmatpush1.msra.mxu0 0.0
    %1406 = vmatprep.subr.mxu0 0.0
    %1407 = vmatpush1.msra.mxu0 0.0
    %1408 = vmatprep.subr.mxu0 0.0
    %1409 = vmatpush1.msra.mxu0 0.0
    %1410 = vmatprep.subr.mxu0 0.0
    %1411 = vmatpush1.msra.mxu0 0.0
    %1412 = vmatprep.subr.mxu0 0.0
    %1413 = vmatpush1.msra.mxu0 0.0
    %1414 = vmatprep.subr.mxu0 0.0
    %1415 = vmatpush1.msra.mxu0 0.0
    %1416 = vmatprep.subr.mxu0 0.0
    %1417 = vmatpush1.msra.mxu0 0.0
    %1418 = vmatprep.subr.mxu0 0.0
    %1419 = vmatpush1.msra.mxu0 %v1396
    %1420 = vmatprep.subr.mxu0 0.0
    %1421 = vmatpush1.msra.mxu0 %v1385
    %1422 = vmatprep.subr.mxu0 0.0
    %1423 = vmatpush1.msra.mxu0 %v1384
    %1424 = vmatprep.subr.mxu0 0.0
    %1425 = vmatpush1.msra.mxu0 %v1383
    %1426 = vmatprep.subr.mxu0 0.0
    %1427 = vmatpush1.msra.mxu0 %v1382
    %1428 = vmatprep.subr.mxu0 0.0
    %1429 = vmatpush1.msra.mxu0 %v1381
    %1430 = vmatprep.subr.mxu0 0.0
    %1431 = vmatpush2.msra.mxu0 0.0
    %1432 = vmatprep.subr.mxu0 0.0
    %1433 = vmatpush2.msra.mxu0 0.0
    %1434 = vmatprep.subr.mxu0 0.0
    %1435 = vmatpush2.msra.mxu0 0.0
    %1436 = vmatprep.subr.mxu0 0.0
    %1437 = vmatpush2.msra.mxu0 0.0
    %1438 = vmatprep.subr.mxu0 0.0
    %1439 = vmatpush2.msra.mxu0 0.0
    %1440 = vmatprep.subr.mxu0 0.0
    %1441 = vmatpush2.msra.mxu0 0.0
    %1442 = vmatprep.subr.mxu0 0.0
    %1443 = vmatpush2.msra.mxu0 0.0
    %1444 = vmatprep.subr.mxu0 0.0
    %1445 = vmatpush2.msra.mxu0 0.0
    %1446 = vmatprep.subr.mxu0 0.0
    %1447 = vmatpush2.msra.mxu0 0.0
    %1448 = vmatprep.subr.mxu0 0.0
    %1449 = vmatpush2.msra.mxu0 0.0
    %1450 = vmatprep.subr.mxu0 0.0
    %1451 = vmatpush2.msra.mxu0 0.0
    %1452 = vmatprep.subr.mxu0 0.0
    %1453 = vmatpush2.msra.mxu0 0.0
    %1454 = vmatprep.subr.mxu0 0.0
    %1455 = vmatpush2.msra.mxu0 0.0
    %1456 = vmatprep.subr.mxu0 0.0
    %1457 = vmatpush2.msra.mxu0 0.0
    %1458 = vmatprep.subr.mxu0 0.0
    %1459 = vmatpush2.msra.mxu0 0.0
    %1460 = vmatprep.subr.mxu0 0.0
    %1461 = vmatpush2.msra.mxu0 0.0
    %1462 = vmatprep.mubr.f32.mxu0 0.0
    %1463 = vmatmul.mubr.f32.gmra.mxu0 %v1393
    %v1464 = vpop.f32.mrf.mxu0
    %v1465 = vadd.f32 %v1390, %v1464
    %v1466 = vpop.f32.mrf.mxu0
    %1467 = vdwg.mxu0
    %v1468 = vmul.f32 %v1465, 0.5
    %v1469 = vtanh.pop %v1468
    %v1470 = vadd.f32 %v1469, 1.0
    %v1471 = vmul.f32 %v1468, %v1470
    %vm1472 = vcmask 261120
    %v1473 = vsel %vm1472, %v1471, 0.0
    %v1474 = vrot.slane %v1473, 4
    %v1475 = vadd.f32 %v1473, %v1474
    %v1476 = vrot.slane %v1475, 2
    %v1477 = vadd.f32 %v1475, %v1476
    %v1478 = vrot.slane %v1477, 1
    %v1479 = vadd.f32 %v1477, %v1478
    %v1480 = vmul.f32 %v1479, %v841
    %v1481 = vsub.f32 %v1471, %v1480
    %v1482 = vmul.f32 %v1481, %v1481
    %v1483 = vsel %vm1472, %v1482, 0.0
    %v1484 = vrot.slane %v1483, 4
    %v1485 = vadd.f32 %v1483, %v1484
    %v1486 = vrot.slane %v1485, 2
    %v1487 = vadd.f32 %v1485, %v1486
    %v1488 = vrot.slane %v1487, 1
    %v1489 = vadd.f32 %v1487, %v1488
    %v1490 = vmul.f32 %v1489, %v841
    %v1491 = vadd.f32 %v1490, 1e-05
    %v1492 = vrsqrt.pop %v1491
    %v1493 = vmul.f32 %v1379, %v1492
    %v1494 = vlaneseq
    %v1495 = vshrl.u32 %v1494, 7
    %v1496 = vsub.s32 1, %v1495
    %v1497 = vrot.slane %v1493, %v1496
    %v1498 = vmul.f32 %v1481, %v1497
    %v1499 = vlaneseq
    %v1500 = vshrl.u32 %v1499, 7
    %v1501 = vsub.s32 2, %v1500
    %v1502 = vrot.slane %v1379, %v1501
    %v1503 = vadd.f32 %v1498, %v1502
    %v1504 = vld [vmem:[%s6 + $0x1c] sm:$0x7]
    %v1505 = vld [vmem:[%s5 + $0x20] sm:$0xff]
    %v1506 = vld [vmem:[%s5 + $0x70] sm:$0xff]
    %v1507 = vld [vmem:[%s5 + $0xc0] sm:$0xff]
    %v1508 = vld [vmem:[%s5 + $0x110] sm:$0xff]
    %v1509 = vlaneseq
    %v1510 = vshrl.u32 %v1509, 7
    %v1511 = vsub.s32 0, %v1510
    %v1512 = vrot.slane %v1504, %v1511
    %v1514 = vsel %vm1472, %v1503, 0
    %1516 = vmatprep.subr.mxu0 0.0
    %1517 = vmatpush1.msra.mxu0 0.0
    %1518 = vmatprep.subr.mxu0 0.0
    %1519 = vmatpush1.msra.mxu0 0.0
    %1520 = vmatprep.subr.mxu0 0.0
    %1521 = vmatpush1.msra.mxu0 0.0
    %1522 = vmatprep.subr.mxu0 0.0
    %1523 = vmatpush1.msra.mxu0 0.0
    %1524 = vmatprep.subr.mxu0 0.0
    %1525 = vmatpush1.msra.mxu0 0.0
    %1526 = vmatprep.subr.mxu0 0.0
    %1527 = vmatpush1.msra.mxu0 0.0
    %1528 = vmatprep.subr.mxu0 0.0
    %1529 = vmatpush1.msra.mxu0 0.0
    %1530 = vmatprep.subr.mxu0 0.0
    %1531 = vmatpush1.msra.mxu0 0.0
    %1532 = vmatprep.subr.mxu0 0.0
    %1533 = vmatpush1.msra.mxu0 0.0
    %1534 = vmatprep.subr.mxu0 0.0
    %1535 = vmatpush1.msra.mxu0 0.0
    %1536 = vmatprep.subr.mxu0 0.0
    %1537 = vmatpush1.msra.mxu0 0.0
    %1538 = vmatprep.subr.mxu0 0.0
    %1539 = vmatpush1.msra.mxu0 0.0
    %1540 = vmatprep.subr.mxu0 0.0
    %1541 = vmatpush1.msra.mxu0 %v1508
    %1542 = vmatprep.subr.mxu0 0.0
    %1543 = vmatpush1.msra.mxu0 %v1507
    %1544 = vmatprep.subr.mxu0 0.0
    %1545 = vmatpush1.msra.mxu0 %v1506
    %1546 = vmatprep.subr.mxu0 0.0
    %1547 = vmatpush1.msra.mxu0 %v1505
    %1548 = vmatprep.subr.mxu0 0.0
    %1549 = vmatpush2.msra.mxu0 0.0
    %1550 = vmatprep.subr.mxu0 0.0
    %1551 = vmatpush2.msra.mxu0 0.0
    %1552 = vmatprep.subr.mxu0 0.0
    %1553 = vmatpush2.msra.mxu0 0.0
    %1554 = vmatprep.subr.mxu0 0.0
    %1555 = vmatpush2.msra.mxu0 0.0
    %1556 = vmatprep.subr.mxu0 0.0
    %1557 = vmatpush2.msra.mxu0 0.0
    %1558 = vmatprep.subr.mxu0 0.0
    %1559 = vmatpush2.msra.mxu0 0.0
    %1560 = vmatprep.subr.mxu0 0.0
    %1561 = vmatpush2.msra.mxu0 0.0
    %1562 = vmatprep.subr.mxu0 0.0
    %1563 = vmatpush2.msra.mxu0 0.0
    %1564 = vmatprep.subr.mxu0 0.0
    %1565 = vmatpush2.msra.mxu0 0.0
    %1566 = vmatprep.subr.mxu0 0.0
    %1567 = vmatpush2.msra.mxu0 0.0
    %1568 = vmatprep.subr.mxu0 0.0
    %1569 = vmatpush2.msra.mxu0 0.0
    %1570 = vmatprep.subr.mxu0 0.0
    %1571 = vmatpush2.msra.mxu0 0.0
    %1572 = vmatprep.subr.mxu0 0.0
    %1573 = vmatpush2.msra.mxu0 0.0
    %1574 = vmatprep.subr.mxu0 0.0
    %1575 = vmatpush2.msra.mxu0 0.0
    %1576 = vmatprep.subr.mxu0 0.0
    %1577 = vmatpush2.msra.mxu0 0.0
    %1578 = vmatprep.subr.mxu0 0.0
    %1579 = vmatpush2.msra.mxu0 0.0
    %1580 = vmatprep.mubr.f32.mxu0 0.0
    %1581 = vmatmul.mubr.f32.gmra.mxu0 %v1514
    %v1582 = vpop.f32.mrf.mxu0
    %v1583 = vadd.f32 %v1512, %v1582
    %v1584 = vpop.f32.mrf.mxu0
    %1585 = vdwg.mxu0
    %v1586 = vmul.f32 %v1583, 0.5
    %v1587 = vtanh.pop %v1586
    %v1588 = vadd.f32 %v1587, 1.0
    %v1589 = vmul.f32 %v1586, %v1588
    %vm1590 = vcmask 130048
    %v1591 = vsel %vm1590, %v1589, 0.0
    %v1592 = vrot.slane %v1591, 4
    %v1593 = vadd.f32 %v1591, %v1592
    %v1594 = vrot.slane %v1593, 2
    %v1595 = vadd.f32 %v1593, %v1594
    %v1596 = vrot.slane %v1595, 1
    %v1597 = vadd.f32 %v1595, %v1596
    %v1598 = vmul.f32 %v1597, %v841
    %v1599 = vsub.f32 %v1589, %v1598
    %v1600 = vmul.f32 %v1599, %v1599
    %v1601 = vsel %vm1590, %v1600, 0.0
    %v1602 = vrot.slane %v1601, 4
    %v1603 = vadd.f32 %v1601, %v1602
    %v1604 = vrot.slane %v1603, 2
    %v1605 = vadd.f32 %v1603, %v1604
    %v1606 = vrot.slane %v1605, 1
    %v1607 = vadd.f32 %v1605, %v1606
    %v1608 = vmul.f32 %v1607, %v841
    %v1609 = vadd.f32 %v1608, 1e-05
    %v1610 = vrsqrt.pop %v1609
    %v1611 = vmul.f32 %v1504, %v1610
    %v1612 = vlaneseq
    %v1613 = vshrl.u32 %v1612, 7
    %v1614 = vsub.s32 1, %v1613
    %v1615 = vrot.slane %v1611, %v1614
    %v1616 = vmul.f32 %v1599, %v1615
    %v1617 = vlaneseq
    %v1618 = vshrl.u32 %v1617, 7
    %v1619 = vsub.s32 2, %v1618
    %v1620 = vrot.slane %v1504, %v1619
    %v1621 = vadd.f32 %v1616, %v1620
    %v1622 = vld [vmem:[%s5 + $0x28] sm:$0xff]
    %v1623 = vld [vmem:[%s5 + $0x78] sm:$0xff]
    %v1624 = vld [vmem:[%s6 + $0x20] sm:$0x1]
    %v1625 = vlaneseq
    %v1626 = vshrl.u32 %v1625, 7
    %v1627 = vsub.s32 0, %v1626
    %v1628 = vrot.slane %v1624, %v1627
    %v1630 = vsel %vm1590, %v1621, 0
    %1632 = vmatprep.subr.mxu0 0.0
    %1633 = vmatpush1.msra.mxu0 0.0
    %1634 = vmatprep.subr.mxu0 0.0
    %1635 = vmatpush1.msra.mxu0 0.0
    %1636 = vmatprep.subr.mxu0 0.0
    %1637 = vmatpush1.msra.mxu0 0.0
    %1638 = vmatprep.subr.mxu0 0.0
    %1639 = vmatpush1.msra.mxu0 0.0
    %1640 = vmatprep.subr.mxu0 0.0
    %1641 = vmatpush1.msra.mxu0 0.0
    %1642 = vmatprep.subr.mxu0 0.0
    %1643 = vmatpush1.msra.mxu0 0.0
    %1644 = vmatprep.subr.mxu0 0.0
    %1645 = vmatpush1.msra.mxu0 0.0
    %1646 = vmatprep.subr.mxu0 0.0
    %1647 = vmatpush1.msra.mxu0 0.0
    %1648 = vmatprep.subr.mxu0 0.0
    %1649 = vmatpush1.msra.mxu0 0.0
    %1650 = vmatprep.subr.mxu0 0.0
    %1651 = vmatpush1.msra.mxu0 0.0
    %1652 = vmatprep.subr.mxu0 0.0
    %1653 = vmatpush1.msra.mxu0 0.0
    %1654 = vmatprep.subr.mxu0 0.0
    %1655 = vmatpush1.msra.mxu0 0.0
    %1656 = vmatprep.subr.mxu0 0.0
    %1657 = vmatpush1.msra.mxu0 0.0
    %1658 = vmatprep.subr.mxu0 0.0
    %1659 = vmatpush1.msra.mxu0 0.0
    %1660 = vmatprep.subr.mxu0 0.0
    %1661 = vmatpush1.msra.mxu0 %v1623
    %1662 = vmatprep.subr.mxu0 0.0
    %1663 = vmatpush1.msra.mxu0 %v1622
    %1664 = vmatprep.subr.mxu0 0.0
    %1665 = vmatpush2.msra.mxu0 0.0
    %1666 = vmatprep.subr.mxu0 0.0
    %1667 = vmatpush2.msra.mxu0 0.0
    %1668 = vmatprep.subr.mxu0 0.0
    %1669 = vmatpush2.msra.mxu0 0.0
    %1670 = vmatprep.subr.mxu0 0.0
    %1671 = vmatpush2.msra.mxu0 0.0
    %1672 = vmatprep.subr.mxu0 0.0
    %1673 = vmatpush2.msra.mxu0 0.0
    %1674 = vmatprep.subr.mxu0 0.0
    %1675 = vmatpush2.msra.mxu0 0.0
    %1676 = vmatprep.subr.mxu0 0.0
    %1677 = vmatpush2.msra.mxu0 0.0
    %1678 = vmatprep.subr.mxu0 0.0
    %1679 = vmatpush2.msra.mxu0 0.0
    %1680 = vmatprep.subr.mxu0 0.0
    %1681 = vmatpush2.msra.mxu0 0.0
    %1682 = vmatprep.subr.mxu0 0.0
    %1683 = vmatpush2.msra.mxu0 0.0
    %1684 = vmatprep.subr.mxu0 0.0
    %1685 = vmatpush2.msra.mxu0 0.0
    %1686 = vmatprep.subr.mxu0 0.0
    %1687 = vmatpush2.msra.mxu0 0.0
    %1688 = vmatprep.subr.mxu0 0.0
    %1689 = vmatpush2.msra.mxu0 0.0
    %1690 = vmatprep.subr.mxu0 0.0
    %1691 = vmatpush2.msra.mxu0 0.0
    %1692 = vmatprep.subr.mxu0 0.0
    %1693 = vmatpush2.msra.mxu0 0.0
    %1694 = vmatprep.subr.mxu0 0.0
    %1695 = vmatpush2.msra.mxu0 0.0
    %1696 = vmatprep.mubr.f32.mxu0 0.0
    %1697 = vmatmul.mubr.f32.gmra.mxu0 %v1630
    %v1698 = vpop.f32.mrf.mxu0
    %v1699 = vadd.f32 %v1628, %v1698
    %v1700 = vpop.f32.mrf.mxu0
    %1701 = vdwg.mxu0
    %v1702 = vmul.f32 %v1699, 0.5
    %v1703 = vtanh.pop %v1702
    %v1704 = vadd.f32 %v1703, 1.0
    %v1705 = vmul.f32 %v1702, %v1704
    %v1706 = vld [vmem:[%s6 + $0x24] sm:$0x7]
    %v1707 = vld [vmem:[%s0] sm:$0xff]
    %v1708 = vld [vmem:[%s5 + $0x30] sm:$0xff]
    %v1709 = vld [vmem:[%s5 + $0x80] sm:$0x1]
    %v1710 = vld [vmem:[%s5 + $0x38] sm:$0x7]
    %v1712 = vsel %vm1260, %v1378, 0
    %v1715 = vsel %vm1301, %v1710, 0
    %1717 = vmatprep.subr.mxu0 0.0
    %1718 = vmatpush1.msra.mxu0 0.0
    %1719 = vmatprep.subr.mxu0 0.0
    %1720 = vmatpush1.msra.mxu0 0.0
    %1721 = vmatprep.subr.mxu0 0.0
    %1722 = vmatpush1.msra.mxu0 0.0
    %1723 = vmatprep.subr.mxu0 0.0
    %1724 = vmatpush1.msra.mxu0 0.0
    %1725 = vmatprep.subr.mxu0 0.0
    %1726 = vmatpush1.msra.mxu0 0.0
    %1727 = vmatprep.subr.mxu0 0.0
    %1728 = vmatpush1.msra.mxu0 0.0
    %1729 = vmatprep.subr.mxu0 0.0
    %1730 = vmatpush1.msra.mxu0 0.0
    %1731 = vmatprep.subr.mxu0 0.0
    %1732 = vmatpush1.msra.mxu0 0.0
    %1733 = vmatprep.subr.mxu0 0.0
    %1734 = vmatpush1.msra.mxu0 0.0
    %1735 = vmatprep.subr.mxu0 0.0
    %1736 = vmatpush1.msra.mxu0 0.0
    %1737 = vmatprep.subr.mxu0 0.0
    %1738 = vmatpush1.msra.mxu0 0.0
    %1739 = vmatprep.subr.mxu0 0.0
    %1740 = vmatpush1.msra.mxu0 0.0
    %1741 = vmatprep.subr.mxu0 0.0
    %1742 = vmatpush1.msra.mxu0 0.0
    %1743 = vmatprep.subr.mxu0 0.0
    %1744 = vmatpush1.msra.mxu0 0.0
    %1745 = vmatprep.subr.mxu0 0.0
    %1746 = vmatpush1.msra.mxu0 0.0
    %1747 = vmatprep.subr.mxu0 0.0
    %1748 = vmatpush1.msra.mxu0 %v1715
    %1749 = vmatprep.subr.mxu0 0.0
    %1750 = vmatpush2.msra.mxu0 0.0
    %1751 = vmatprep.subr.mxu0 0.0
    %1752 = vmatpush2.msra.mxu0 0.0
    %1753 = vmatprep.subr.mxu0 0.0
    %1754 = vmatpush2.msra.mxu0 0.0
    %1755 = vmatprep.subr.mxu0 0.0
    %1756 = vmatpush2.msra.mxu0 0.0
    %1757 = vmatprep.subr.mxu0 0.0
    %1758 = vmatpush2.msra.mxu0 0.0
    %1759 = vmatprep.subr.mxu0 0.0
    %1760 = vmatpush2.msra.mxu0 0.0
    %1761 = vmatprep.subr.mxu0 0.0
    %1762 = vmatpush2.msra.mxu0 0.0
    %1763 = vmatprep.subr.mxu0 0.0
    %1764 = vmatpush2.msra.mxu0 0.0
    %1765 = vmatprep.subr.mxu0 0.0
    %1766 = vmatpush2.msra.mxu0 0.0
    %1767 = vmatprep.subr.mxu0 0.0
    %1768 = vmatpush2.msra.mxu0 0.0
    %1769 = vmatprep.subr.mxu0 0.0
    %1770 = vmatpush2.msra.mxu0 0.0
    %1771 = vmatprep.subr.mxu0 0.0
    %1772 = vmatpush2.msra.mxu0 0.0
    %1773 = vmatprep.subr.mxu0 0.0
    %1774 = vmatpush2.msra.mxu0 0.0
    %1775 = vmatprep.subr.mxu0 0.0
    %1776 = vmatpush2.msra.mxu0 0.0
    %1777 = vmatprep.subr.mxu0 0.0
    %1778 = vmatpush2.msra.mxu0 0.0
    %1779 = vmatprep.subr.mxu0 0.0
    %1780 = vmatpush2.msra.mxu0 0.0
    %1781 = vmatprep.mubr.f32.mxu0 0.0
    %1782 = vmatmul.mubr.f32.gmra.mxu0 %v1712
    %v1783 = vpop.f32.mrf.mxu0
    %v1784 = vadd.f32 0.0, %v1783
    %v1785 = vpop.f32.mrf.mxu0
    %1786 = vdwg.mxu0
    %vm1787 = vcmask 72704
    %v1789 = vsel %vm1787, %v1707, 0
    %vm1791 = vcmask 1040384
    %v1793 = vsel %vm1791, %v1709, 0
    %1795 = vmatprep.subr.mxu0 0.0
    %1796 = vmatpush1.msra.mxu0 0.0
    %1797 = vmatprep.subr.mxu0 0.0
    %1798 = vmatpush1.msra.mxu0 0.0
    %1799 = vmatprep.subr.mxu0 0.0
    %1800 = vmatpush1.msra.mxu0 0.0
    %1801 = vmatprep.subr.mxu0 0.0
    %1802 = vmatpush1.msra.mxu0 0.0
    %1803 = vmatprep.subr.mxu0 0.0
    %1804 = vmatpush1.msra.mxu0 0.0
    %1805 = vmatprep.subr.mxu0 0.0
    %1806 = vmatpush1.msra.mxu0 0.0
    %1807 = vmatprep.subr.mxu0 0.0
    %1808 = vmatpush1.msra.mxu0 0.0
    %1809 = vmatprep.subr.mxu0 0.0
    %1810 = vmatpush1.msra.mxu0 0.0
    %1811 = vmatprep.subr.mxu0 0.0
    %1812 = vmatpush1.msra.mxu0 0.0
    %1813 = vmatprep.subr.mxu0 0.0
    %1814 = vmatpush1.msra.mxu0 0.0
    %1815 = vmatprep.subr.mxu0 0.0
    %1816 = vmatpush1.msra.mxu0 0.0
    %1817 = vmatprep.subr.mxu0 0.0
    %1818 = vmatpush1.msra.mxu0 0.0
    %1819 = vmatprep.subr.mxu0 0.0
    %1820 = vmatpush1.msra.mxu0 0.0
    %1821 = vmatprep.subr.mxu0 0.0
    %1822 = vmatpush1.msra.mxu0 0.0
    %1823 = vmatprep.subr.mxu0 0.0
    %1824 = vmatpush1.msra.mxu0 %v1793
    %1825 = vmatprep.subr.mxu0 0.0
    %1826 = vmatpush1.msra.mxu0 %v1708
    %1827 = vmatprep.subr.mxu0 0.0
    %1828 = vmatpush2.msra.mxu0 0.0
    %1829 = vmatprep.subr.mxu0 0.0
    %1830 = vmatpush2.msra.mxu0 0.0
    %1831 = vmatprep.subr.mxu0 0.0
    %1832 = vmatpush2.msra.mxu0 0.0
    %1833 = vmatprep.subr.mxu0 0.0
    %1834 = vmatpush2.msra.mxu0 0.0
    %1835 = vmatprep.subr.mxu0 0.0
    %1836 = vmatpush2.msra.mxu0 0.0
    %1837 = vmatprep.subr.mxu0 0.0
    %1838 = vmatpush2.msra.mxu0 0.0
    %1839 = vmatprep.subr.mxu0 0.0
    %1840 = vmatpush2.msra.mxu0 0.0
    %1841 = vmatprep.subr.mxu0 0.0
    %1842 = vmatpush2.msra.mxu0 0.0
    %1843 = vmatprep.subr.mxu0 0.0
    %1844 = vmatpush2.msra.mxu0 0.0
    %1845 = vmatprep.subr.mxu0 0.0
    %1846 = vmatpush2.msra.mxu0 0.0
    %1847 = vmatprep.subr.mxu0 0.0
    %1848 = vmatpush2.msra.mxu0 0.0
    %1849 = vmatprep.subr.mxu0 0.0
    %1850 = vmatpush2.msra.mxu0 0.0
    %1851 = vmatprep.subr.mxu0 0.0
    %1852 = vmatpush2.msra.mxu0 0.0
    %1853 = vmatprep.subr.mxu0 0.0
    %1854 = vmatpush2.msra.mxu0 0.0
    %1855 = vmatprep.subr.mxu0 0.0
    %1856 = vmatpush2.msra.mxu0 0.0
    %1857 = vmatprep.subr.mxu0 0.0
    %1858 = vmatpush2.msra.mxu0 0.0
    %1859 = vmatprep.mubr.f32.mxu0 0.0
    %1860 = vmatmul.mubr.f32.gmra.mxu0 %v1789
    %v1861 = vpop.f32.mrf.mxu0
    %v1862 = vadd.f32 %v1784, %v1861
    %v1863 = vpop.f32.mrf.mxu0
    %1864 = vdwg.mxu0
    %v1865 = vld [vmem:[%s5 + $0x40] sm:$0xff]
    %v1866 = vld [vmem:[%s5 + $0x90] sm:$0xff]
    %v1868 = vsel %vm1590, %v1705, 0
    %1870 = vmatprep.subr.mxu0 0.0
    %1871 = vmatpush1.msra.mxu0 0.0
    %1872 = vmatprep.subr.mxu0 0.0
    %1873 = vmatpush1.msra.mxu0 0.0
    %1874 = vmatprep.subr.mxu0 0.0
    %1875 = vmatpush1.msra.mxu0 0.0
    %1876 = vmatprep.subr.mxu0 0.0
    %1877 = vmatpush1.msra.mxu0 0.0
    %1878 = vmatprep.subr.mxu0 0.0
    %1879 = vmatpush1.msra.mxu0 0.0
    %1880 = vmatprep.subr.mxu0 0.0
    %1881 = vmatpush1.msra.mxu0 0.0
    %1882 = vmatprep.subr.mxu0 0.0
    %1883 = vmatpush1.msra.mxu0 0.0
    %1884 = vmatprep.subr.mxu0 0.0
    %1885 = vmatpush1.msra.mxu0 0.0
    %1886 = vmatprep.subr.mxu0 0.0
    %1887 = vmatpush1.msra.mxu0 0.0
    %1888 = vmatprep.subr.mxu0 0.0
    %1889 = vmatpush1.msra.mxu0 0.0
    %1890 = vmatprep.subr.mxu0 0.0
    %1891 = vmatpush1.msra.mxu0 0.0
    %1892 = vmatprep.subr.mxu0 0.0
    %1893 = vmatpush1.msra.mxu0 0.0
    %1894 = vmatprep.subr.mxu0 0.0
    %1895 = vmatpush1.msra.mxu0 0.0
    %1896 = vmatprep.subr.mxu0 0.0
    %1897 = vmatpush1.msra.mxu0 0.0
    %1898 = vmatprep.subr.mxu0 0.0
    %1899 = vmatpush1.msra.mxu0 %v1866
    %1900 = vmatprep.subr.mxu0 0.0
    %1901 = vmatpush1.msra.mxu0 %v1865
    %1902 = vmatprep.subr.mxu0 0.0
    %1903 = vmatpush2.msra.mxu0 0.0
    %1904 = vmatprep.subr.mxu0 0.0
    %1905 = vmatpush2.msra.mxu0 0.0
    %1906 = vmatprep.subr.mxu0 0.0
    %1907 = vmatpush2.msra.mxu0 0.0
    %1908 = vmatprep.subr.mxu0 0.0
    %1909 = vmatpush2.msra.mxu0 0.0
    %1910 = vmatprep.subr.mxu0 0.0
    %1911 = vmatpush2.msra.mxu0 0.0
    %1912 = vmatprep.subr.mxu0 0.0
    %1913 = vmatpush2.msra.mxu0 0.0
    %1914 = vmatprep.subr.mxu0 0.0
    %1915 = vmatpush2.msra.mxu0 0.0
    %1916 = vmatprep.subr.mxu0 0.0
    %1917 = vmatpush2.msra.mxu0 0.0
    %1918 = vmatprep.subr.mxu0 0.0
    %1919 = vmatpush2.msra.mxu0 0.0
    %1920 = vmatprep.subr.mxu0 0.0
    %1921 = vmatpush2.msra.mxu0 0.0
    %1922 = vmatprep.subr.mxu0 0.0
    %1923 = vmatpush2.msra.mxu0 0.0
    %1924 = vmatprep.subr.mxu0 0.0
    %1925 = vmatpush2.msra.mxu0 0.0
    %1926 = vmatprep.subr.mxu0 0.0
    %1927 = vmatpush2.msra.mxu0 0.0
    %1928 = vmatprep.subr.mxu0 0.0
    %1929 = vmatpush2.msra.mxu0 0.0
    %1930 = vmatprep.subr.mxu0 0.0
    %1931 = vmatpush2.msra.mxu0 0.0
    %1932 = vmatprep.subr.mxu0 0.0
    %1933 = vmatpush2.msra.mxu0 0.0
    %1934 = vmatprep.mubr.f32.mxu0 0.0
    %1935 = vmatmul.mubr.f32.gmra.mxu0 %v1868
    %v1936 = vpop.f32.mrf.mxu0
    %v1937 = vadd.f32 0.0, %v1936
    %v1938 = vpop.f32.mrf.mxu0
    %1939 = vdwg.mxu0
    %v1940 = vadd.f32 %v1862, %v1937
    %v1941 = vlaneseq
    %v1942 = vshrl.u32 %v1941, 7
    %v1943 = vsub.s32 0, %v1942
    %v1944 = vrot.slane %v1706, %v1943
    %v1945 = vadd.f32 %v1940, %v1944
    %v1946 = vmul.f32 %v1945, 0.5
    %v1947 = vtanh.pop %v1946
    %v1948 = vadd.f32 %v1947, 1.0
    %v1949 = vmul.f32 %v1946, %v1948
    %v1950 = vsel %vm794, %v1949, 0.0
    %v1951 = vrot.slane %v1950, 4
    %v1952 = vadd.f32 %v1950, %v1951
    %v1953 = vrot.slane %v1952, 2
    %v1954 = vadd.f32 %v1952, %v1953
    %v1955 = vrot.slane %v1954, 1
    %v1956 = vadd.f32 %v1954, %v1955
    %v1957 = vmul.f32 %v1956, %v841
    %v1958 = vsub.f32 %v1949, %v1957
    %v1959 = vmul.f32 %v1958, %v1958
    %v1960 = vsel %vm794, %v1959, 0.0
    %v1961 = vrot.slane %v1960, 4
    %v1962 = vadd.f32 %v1960, %v1961
    %v1963 = vrot.slane %v1962, 2
    %v1964 = vadd.f32 %v1962, %v1963
    %v1965 = vrot.slane %v1964, 1
    %v1966 = vadd.f32 %v1964, %v1965
    %v1967 = vmul.f32 %v1966, %v841
    %v1968 = vadd.f32 %v1967, 1e-05
    %v1969 = vrsqrt.pop %v1968
    %v1970 = vmul.f32 %v1706, %v1969
    %v1971 = vlaneseq
    %v1972 = vshrl.u32 %v1971, 7
    %v1973 = vsub.s32 1, %v1972
    %v1974 = vrot.slane %v1970, %v1973
    %v1975 = vmul.f32 %v1958, %v1974
    %v1976 = vlaneseq
    %v1977 = vshrl.u32 %v1976, 7
    %v1978 = vsub.s32 2, %v1977
    %v1979 = vrot.slane %v1706, %v1978
    %v1980 = vadd.f32 %v1975, %v1979
    %v1981 = vld [vmem:[%s6 + $0x28] sm:$0x7]
    %v1982 = vld [vmem:[%s5 + $0x48] sm:$0xff]
    %v1983 = vld [vmem:[%s5 + $0x98] sm:$0xff]
    %v1984 = vld [vmem:[%s5 + $0xe8] sm:$0xff]
    %v1985 = vld [vmem:[%s5 + $0x138] sm:$0xff]
    %v1986 = vld [vmem:[%s5 + $0x188] sm:$0xff]
    %v1987 = vld [vmem:[%s5 + $0x1d8] sm:$0xff]
    %v1988 = vld [vmem:[%s5 + $0x228] sm:$0xff]
    %v1989 = vld [vmem:[%s5 + $0x278] sm:$0xff]
    %v1990 = vlaneseq
    %v1991 = vshrl.u32 %v1990, 7
    %v1992 = vsub.s32 0, %v1991
    %v1993 = vrot.slane %v1981, %v1992
    %v1995 = vsel %vm794, %v1980, 0
    %1997 = vmatprep.subr.mxu0 0.0
    %1998 = vmatpush1.msra.mxu0 0.0
    %1999 = vmatprep.subr.mxu0 0.0
    %2000 = vmatpush1.msra.mxu0 0.0
    %2001 = vmatprep.subr.mxu0 0.0
    %2002 = vmatpush1.msra.mxu0 0.0
    %2003 = vmatprep.subr.mxu0 0.0
    %2004 = vmatpush1.msra.mxu0 0.0
    %2005 = vmatprep.subr.mxu0 0.0
    %2006 = vmatpush1.msra.mxu0 0.0
    %2007 = vmatprep.subr.mxu0 0.0
    %2008 = vmatpush1.msra.mxu0 0.0
    %2009 = vmatprep.subr.mxu0 0.0
    %2010 = vmatpush1.msra.mxu0 0.0
    %2011 = vmatprep.subr.mxu0 0.0
    %2012 = vmatpush1.msra.mxu0 0.0
    %2013 = vmatprep.subr.mxu0 0.0
    %2014 = vmatpush1.msra.mxu0 %v1989
    %2015 = vmatprep.subr.mxu0 0.0
    %2016 = vmatpush1.msra.mxu0 %v1988
    %2017 = vmatprep.subr.mxu0 0.0
    %2018 = vmatpush1.msra.mxu0 %v1987
    %2019 = vmatprep.subr.mxu0 0.0
    %2020 = vmatpush1.msra.mxu0 %v1986
    %2021 = vmatprep.subr.mxu0 0.0
    %2022 = vmatpush1.msra.mxu0 %v1985
    %2023 = vmatprep.subr.mxu0 0.0
    %2024 = vmatpush1.msra.mxu0 %v1984
    %2025 = vmatprep.subr.mxu0 0.0
    %2026 = vmatpush1.msra.mxu0 %v1983
    %2027 = vmatprep.subr.mxu0 0.0
    %2028 = vmatpush1.msra.mxu0 %v1982
    %2029 = vmatprep.subr.mxu0 0.0
    %2030 = vmatpush2.msra.mxu0 0.0
    %2031 = vmatprep.subr.mxu0 0.0
    %2032 = vmatpush2.msra.mxu0 0.0
    %2033 = vmatprep.subr.mxu0 0.0
    %2034 = vmatpush2.msra.mxu0 0.0
    %2035 = vmatprep.subr.mxu0 0.0
    %2036 = vmatpush2.msra.mxu0 0.0
    %2037 = vmatprep.subr.mxu0 0.0
    %2038 = vmatpush2.msra.mxu0 0.0
    %2039 = vmatprep.subr.mxu0 0.0
    %2040 = vmatpush2.msra.mxu0 0.0
    %2041 = vmatprep.subr.mxu0 0.0
    %2042 = vmatpush2.msra.mxu0 0.0
    %2043 = vmatprep.subr.mxu0 0.0
    %2044 = vmatpush2.msra.mxu0 0.0
    %2045 = vmatprep.subr.mxu0 0.0
    %2046 = vmatpush2.msra.mxu0 0.0
    %2047 = vmatprep.subr.mxu0 0.0
    %2048 = vmatpush2.msra.mxu0 0.0
    %2049 = vmatprep.subr.mxu0 0.0
    %2050 = vmatpush2.msra.mxu0 0.0
    %2051 = vmatprep.subr.mxu0 0.0
    %2052 = vmatpush2.msra.mxu0 0.0
    %2053 = vmatprep.subr.mxu0 0.0
    %2054 = vmatpush2.msra.mxu0 0.0
    %2055 = vmatprep.subr.mxu0 0.0
    %2056 = vmatpush2.msra.mxu0 0.0
    %2057 = vmatprep.subr.mxu0 0.0
    %2058 = vmatpush2.msra.mxu0 0.0
    %2059 = vmatprep.subr.mxu0 0.0
    %2060 = vmatpush2.msra.mxu0 0.0
    %2061 = vmatprep.mubr.f32.mxu0 0.0
    %2062 = vmatmul.mubr.f32.gmra.mxu0 %v1995
    %v2063 = vpop.f32.mrf.mxu0
    %v2064 = vadd.f32 %v1993, %v2063
    %v2065 = vpop.f32.mrf.mxu0
    %2066 = vdwg.mxu0
    %v2067 = vmul.f32 %v2064, 0.5
    %v2068 = vtanh.pop %v2067
    %v2069 = vadd.f32 %v2068, 1.0
    %v2070 = vmul.f32 %v2067, %v2069
    %v2071 = vrot.slane %v2070, 4
    %v2072 = vadd.f32 %v2070, %v2071
    %v2073 = vrot.slane %v2072, 2
    %v2074 = vadd.f32 %v2072, %v2073
    %v2075 = vrot.slane %v2074, 1
    %v2076 = vadd.f32 %v2074, %v2075
    %v2077 = vmul.f32 %v2076, %v841
    %v2078 = vsub.f32 %v2070, %v2077
    %v2079 = vmul.f32 %v2078, %v2078
    %v2080 = vrot.slane %v2079, 4
    %v2081 = vadd.f32 %v2079, %v2080
    %v2082 = vrot.slane %v2081, 2
    %v2083 = vadd.f32 %v2081, %v2082
    %v2084 = vrot.slane %v2083, 1
    %v2085 = vadd.f32 %v2083, %v2084
    %v2086 = vmul.f32 %v2085, %v841
    %v2087 = vadd.f32 %v2086, 1e-05
    %v2088 = vrsqrt.pop %v2087
    %v2089 = vmul.f32 %v1981, %v2088
    %v2090 = vlaneseq
    %v2091 = vshrl.u32 %v2090, 7
    %v2092 = vsub.s32 1, %v2091
    %v2093 = vrot.slane %v2089, %v2092
    %v2094 = vmul.f32 %v2078, %v2093
    %v2095 = vlaneseq
    %v2096 = vshrl.u32 %v2095, 7
    %v2097 = vsub.s32 2, %v2096
    %v2098 = vrot.slane %v1981, %v2097
    %v2099 = vadd.f32 %v2094, %v2098
    %2100 = vst [vmem:[#allocation5] sm:$0xff] %v2099
    // Predicated region
    $region60: #{bid_predictor_forward.1} parent=1 // pred_check
      _
    $region61: #{bid_predictor_forward.1} parent=1 // pred_check_branch
      %2102 = sbr.rel (0) target = $region63
    $region62: #{bid_predictor_forward.1} parent=1 // pred_region
      %s2104 = ssub.s32 128, 128
      %2105 = vsyncadd [#allocation6], %s2104
      %s2107 = sshll.u32 [#allocation5], 4
      %s2108 = int_to_ptr.vmem [resolvable:$true] %s2107
      %2110 = dma.vmem_to_hbm [thread:$0]  %s2108, 128, %s7, [#allocation6]
    $region63: #{bid_predictor_forward.1} parent=1 // pred_fallthru
      _
    // Predicated region
    $region64: #{bid_predictor_forward.1} parent=1 // pred_check
      _
    $region65: #{bid_predictor_forward.1} parent=1 // pred_check_branch
      %2112 = sbr.rel (0) target = $region67
    $region66: #{bid_predictor_forward.1} parent=1 // pred_region
      %2113 = dma.done [#allocation6], 128
    $region67: #{bid_predictor_forward.1} parent=1 // pred_fallthru
      _
    %2114 = vsyncpa [#allocation6], 1
  %2115 = vsyncmov [#allocation3]
  %s2116 = vpop.sfrf %2115
  %p2117 = scmp.eq.s32.totalorder %s2116, 0
  %p2118 = pneg %p2117
  %2120 = shalt.err (%p2118)
  %s2121 = scalar_lea.sflag [#allocation3], 1
  %2122 = vsyncmov %s2121
  %s2123 = vpop.sfrf %2122
  %p2124 = scmp.eq.s32.totalorder %s2123, 0
  %p2125 = pneg %p2124
  %2127 = shalt.err (%p2125)

</llo_original>
